<compile_context>
chip_gen: v7x
topology: tpu7x:2x2x1
jax: 0.10.0
libtpu: 0.0.40
codegen_flags: <defaults>
</compile_context>

<pallas_src>
import functools
import math

import jax
import jax.numpy as jnp
from jax import lax
from jax.experimental import pallas as pl
from jax.experimental.pallas import tpu as pltpu


def _gelu(x, approximate):
    if approximate:
        # tanh approximation -> transcendental executes on the (otherwise idle)
        # EUP slot instead of a long VALU erf polynomial chain.
        c = math.sqrt(2.0 / math.pi)
        return 0.5 * x * (1.0 + jnp.tanh(c * (x + 0.044715 * x * x * x)))
    # nn.GELU() default = exact (erf-based) GELU, computed in f32.
    return 0.5 * x * (1.0 + lax.erf(x * (1.0 / math.sqrt(2.0))))


def _conv1d_k3(x, w_ref, b_ref, keep_left, keep_right, matmul_dtype):
    """Channels-last Conv1d(k=3, pad=1) over a flattened (M, C) block.

    x:          (M, C)   f32, M = block_b*L rows (block_b sequences back to back)
    w_ref:      (3, C, Hp) weight ref (tap-major), already in matmul_dtype
    b_ref:      (1, Hp)  f32 bias ref
    keep_*:     (M, 1)   f32, zero on the first/last row of each sequence

    y[t] = x[t-1] @ w[0] + x[t] @ w[1] + x[t+1] @ w[2] + b, with zero padding at
    the sequence ends reproduced by the keep-masks (rows rolled across sequence
    or block boundaries are zeroed BEFORE the matmuls).  Three accumulated dots
    instead of an im2col concat: no (M, 3C) temporary is ever materialized.
    """
    xl = (keep_left * jnp.roll(x, 1, axis=0)).astype(matmul_dtype)    # x[t-1]
    xc = x.astype(matmul_dtype)                                       # x[t]
    xr = (keep_right * jnp.roll(x, -1, axis=0)).astype(matmul_dtype)  # x[t+1]
    y = jnp.dot(xl, w_ref[0], preferred_element_type=jnp.float32)
    y = y + jnp.dot(xc, w_ref[1], preferred_element_type=jnp.float32)
    y = y + jnp.dot(xr, w_ref[2], preferred_element_type=jnp.float32)
    return y + b_ref[...]


def hist_encoder_kernel(x_ref, pool_ref, w1_ref, b1_ref, w2_ref, b2_ref,
                        w3_ref, b3_ref, out_ref, *, L, approx_gelu,
                        matmul_dtype):
    # x_ref: (M, Cin) f32; pool_ref: (block_b, M) f32; out_ref: (1, block_b, Hp)
    M, _ = x_ref.shape

    # Per-sequence boundary keep-masks (Conv1d zero padding), computed once per
    # grid step and reused by all three layers.  M is a multiple of L.
    t = lax.broadcasted_iota(jnp.int32, (M, 1), 0) % L
    keep_left = (t > 0).astype(jnp.float32)       # zero on first row of each seq
    keep_right = (t < L - 1).astype(jnp.float32)  # zero on last  row of each seq

    x = x_ref[...].astype(jnp.float32)
    z = _gelu(_conv1d_k3(x, w1_ref, b1_ref, keep_left, keep_right, matmul_dtype),
              approx_gelu)
    z = _gelu(_conv1d_k3(z, w2_ref, b2_ref, keep_left, keep_right, matmul_dtype),
              approx_gelu)
    z = _gelu(_conv1d_k3(z, w3_ref, b3_ref, keep_left, keep_right, matmul_dtype),
              approx_gelu)

    # AdaptiveAvgPool1d(1): block-diagonal averaging matrix (entries 1/L) keeps
    # the time reduction on the MXU and writes a lane-dense (block_b, Hp) slab.
    out_ref[0] = jnp.dot(pool_ref[...], z, preferred_element_type=jnp.float32)


def _round_up(x, m):
    return ((x + m - 1) // m) * m


def _device_defaults():
    """(target_rows, min_grid_steps) tuned per TPU generation."""
    kind = ""
    try:
        kind = jax.devices()[0].device_kind.lower()
    except Exception:  # pragma: no cover - be robust to exotic backends
        pass
    if "v7" in kind:
        return 384, 2    # 64 MiB VMEM -> smaller blocks; 2 TCs -> >=2 grid steps
    if "v6" in kind:
        return 1024, 1   # 128 MiB VMEM, 1 TC -> biggest block wins
    return 512, 1        # v5e / unknown: conservative block, single TC


def _pick_block_b(B, L, target_rows, min_steps):
    """Largest divisor of B with block_b*L <= target_rows, then (optionally)
    split further so the grid has >= min_steps steps."""
    divisors = [d for d in range(1, B + 1) if B % d == 0]
    cands = [d for d in divisors if d * L <= target_rows] or [1]
    best = max(cands)
    while B // best < min_steps and best > 1:
        smaller = [d for d in divisors if d < best]
        if not smaller:
            break
        best = max(smaller)
    return best


def _estimate_vmem_bytes(M, Cin, Hp, block_b, mm_itemsize):
    """Rough per-step VMEM footprint (double-buffered operands + temporaries)."""
    consts = ((3 * Cin * Hp + 2 * 3 * Hp * Hp) * mm_itemsize   # weights
              + 3 * Hp * 4                                     # biases
              + block_b * M * 4)                               # pool matrix
    streamed = 2 * (M * Cin * 4) + 2 * (block_b * Hp * 4)      # in/out blocks
    temps = 6 * M * Hp * 4                                     # taps/activations
    return 2 * consts + streamed + temps


def simple_hist_encoder(h, params, *, block_b=None,
                        matmul_dtype=jnp.bfloat16, approx_gelu=True,
                        vmem_limit_bytes=None):
    """h: (B, L, Cin) f32; params: [(w, b)]*3 with w (3, Cin_l, H), b (1, H).

    Returns (B, H): mean over L of GELU(Conv1d(k=3, pad=1)) applied 3x.
    Defaults are the fast path (bf16 MXU + tanh GELU); use
    matmul_dtype=jnp.float32, approx_gelu=False for exact PyTorch numerics."""
    B, L, Cin = h.shape
    (w1, b1), (w2, b2), (w3, b3) = params
    H = w1.shape[2]
    Hp = _round_up(H, 128)   # lane-dense hidden dim (padding stripped at the end)

    if block_b is None:
        target_rows, min_steps = _device_defaults()
        block_b = _pick_block_b(B, L, target_rows, min_steps)
    assert B % block_b == 0, (B, block_b)
    G = B // block_b
    M = block_b * L

    # ---- host-side weight prep: pad H -> Hp (and layer-2/3 contraction rows),
    # keep taps stacked on the leading axis, cast to the MXU dtype. -------------
    def prep_w(w, cin_pad):
        k, c, hh = w.shape
        wp = jnp.zeros((k, cin_pad, Hp), jnp.float32)
        wp = wp.at[:, :c, :hh].set(w.astype(jnp.float32))
        return wp.astype(matmul_dtype)

    def prep_b(b):
        bp = jnp.zeros((1, Hp), jnp.float32)
        return bp.at[:, :H].set(b.astype(jnp.float32).reshape(1, H))

    w1p = prep_w(w1, Cin)    # (3, Cin, Hp)
    w2p = prep_w(w2, Hp)     # (3, Hp, Hp)
    w3p = prep_w(w3, Hp)     # (3, Hp, Hp)
    b1p, b2p, b3p = prep_b(b1), prep_b(b2), prep_b(b3)

    # Block-diagonal averaging matrix for AdaptiveAvgPool1d(1): (block_b, M),
    # row b has 1/L over that sequence's L rows.
    rows = jnp.arange(block_b, dtype=jnp.int32)[:, None]
    cols = jnp.arange(M, dtype=jnp.int32)[None, :] // L
    pool_mat = (rows == cols).astype(jnp.float32) * (1.0 / L)

    # 2-D input slab so the kernel never reshapes: rows ordered (batch, time).
    x2d = h.reshape(B * L, Cin)

    if vmem_limit_bytes is None:
        est = _estimate_vmem_bytes(M, Cin, Hp, block_b,
                                   jnp.dtype(matmul_dtype).itemsize)
        if est > (12 << 20):   # approaching the v5e 16 MiB scoped default
            vmem_limit_bytes = int(min(2 * est, 96 << 20))

    kernel = functools.partial(hist_encoder_kernel, L=L,
                               approx_gelu=approx_gelu,
                               matmul_dtype=matmul_dtype)

    const2 = lambda g: (0, 0)
    const3 = lambda g: (0, 0, 0)

    # TODO(synk): on v7x at production H, single-buffer the constant
    # weight/bias/pool specs with pipeline_mode=pl.Buffered(1) to halve their
    # VMEM footprint (their index_map never changes across the grid).
    out = pl.pallas_call(
        kernel,
        out_shape=jax.ShapeDtypeStruct((G, block_b, Hp), jnp.float32),
        grid_spec=pltpu.PrefetchScalarGridSpec(
            num_scalar_prefetch=0,
            grid=(G,),
            in_specs=[
                pl.BlockSpec((M, Cin), lambda g: (g, 0)),       # x slab
                pl.BlockSpec((block_b, M), const2),             # pool matrix
                pl.BlockSpec((3, Cin, Hp), const3),             # w1
                pl.BlockSpec((1, Hp), const2),                  # b1
                pl.BlockSpec((3, Hp, Hp), const3),              # w2
                pl.BlockSpec((1, Hp), const2),                  # b2
                pl.BlockSpec((3, Hp, Hp), const3),              # w3
                pl.BlockSpec((1, Hp), const2),                  # b3
            ],
            out_specs=pl.BlockSpec((1, block_b, Hp), lambda g: (g, 0, 0)),
        ),
        compiler_params=pltpu.CompilerParams(
            dimension_semantics=("parallel",),
            vmem_limit_bytes=vmem_limit_bytes),
    )(x2d, pool_mat, w1p, b1p, w2p, b2p, w3p, b3p)

    # (G, block_b, Hp) -> (B, Hp), strip the lane padding.
    return out.reshape(B, Hp)[:, :H]


def init_params(key, in_channels, hidden, n_layers=3, kernel_size=3):
    """PyTorch Conv1d default init (uniform +-1/sqrt(fan_in)).

    Weight stored as (k, Cin, Cout) = transpose of PyTorch's (Cout, Cin, k)."""
    params = []
    C = in_channels
    for _ in range(n_layers):
        key, kw, kb = jax.random.split(key, 3)
        bound = 1.0 / math.sqrt(C * kernel_size)
        w = jax.random.uniform(kw, (kernel_size, C, hidden), jnp.float32,
                               -bound, bound)
        b = jax.random.uniform(kb, (1, hidden), jnp.float32, -bound, bound)
        params.append((w, b))
        C = hidden
    return params


def reference(h, params):
    """Pure-JAX reference of the PyTorch forward (NCW conv, exact GELU)."""
    z = jnp.transpose(h, (0, 2, 1)).astype(jnp.float32)    # (B, Cin, L)
    for (w, b) in params:
        w_oik = jnp.transpose(w, (2, 1, 0))                # (Cout, Cin, 3)
        z = lax.conv_general_dilated(
            z, w_oik, window_strides=(1,), padding=[(1, 1)],
            dimension_numbers=("NCH", "OIH", "NCH"))
        z = _gelu(z + b.reshape(1, -1, 1), approximate=False)
    return jnp.mean(z, axis=-1)                            # (B, H)


if __name__ == "__main__":
    key = jax.random.PRNGKey(0)
    B, L, Cin, H = 8, 16, 4, 32
    kx, kp = jax.random.split(key)
    h = jax.random.normal(kx, (B, L, Cin), jnp.float32)
    params = init_params(kp, Cin, H, n_layers=3)

    ref = reference(h, params)

    # Validation mode (f32 MXU + exact erf GELU): matches PyTorch to 1e-4.
    out_exact = jax.block_until_ready(
        simple_hist_encoder(h, params, matmul_dtype=jnp.float32,
                            approx_gelu=False))
    assert out_exact.shape == (B, H), out_exact.shape
    err_exact = float(jnp.max(jnp.abs(out_exact - ref)))
    assert jnp.allclose(out_exact, ref, atol=1e-4, rtol=1e-4), err_exact

    # Default fast path (bf16 MXU + tanh GELU): small, expected numeric drift.
    out_fast = jax.block_until_ready(simple_hist_encoder(h, params))
    assert out_fast.shape == (B, H), out_fast.shape
    err_fast = float(jnp.max(jnp.abs(out_fast - ref)))
    assert jnp.allclose(out_fast, ref, atol=5e-2, rtol=5e-2), err_fast

    print("KERNEL_OK")
</pallas_src>

<mosaic_0001>
module attributes {stable_mosaic.version = 11 : i64} {
  func.func @hist_encoder_kernel(%arg0: i32, %arg1: memref<128x4xf32, #tpu.memory_space<vmem>>, %arg2: memref<8x128xf32, #tpu.memory_space<vmem>>, %arg3: memref<3x4x128xf32, #tpu.memory_space<vmem>>, %arg4: memref<1x128xf32, #tpu.memory_space<vmem>>, %arg5: memref<3x128x128xf32, #tpu.memory_space<vmem>>, %arg6: memref<1x128xf32, #tpu.memory_space<vmem>>, %arg7: memref<3x128x128xf32, #tpu.memory_space<vmem>>, %arg8: memref<1x128xf32, #tpu.memory_space<vmem>>, %arg9: memref<1x8x128xf32, #tpu.memory_space<vmem>>) attributes {dimension_semantics = [#tpu.dimension_semantics<parallel>], iteration_bounds = array<i64: 1>, scalar_prefetch = 0 : i64, scratch_operands = 0 : i64, tpu.core_type = #tpu.core_type<tc>, window_params = [{transform_indices = @transform_0, window_bounds = array<i64: 128, 4>}, {pipeline_mode = #tpu.pipeline_mode<synchronous>, transform_indices = @transform_1, window_bounds = array<i64: 8, 128>}, {pipeline_mode = #tpu.pipeline_mode<synchronous>, transform_indices = @transform_2, window_bounds = array<i64: 3, 4, 128>}, {pipeline_mode = #tpu.pipeline_mode<synchronous>, transform_indices = @transform_3, window_bounds = array<i64: 1, 128>}, {pipeline_mode = #tpu.pipeline_mode<synchronous>, transform_indices = @transform_4, window_bounds = array<i64: 3, 128, 128>}, {pipeline_mode = #tpu.pipeline_mode<synchronous>, transform_indices = @transform_5, window_bounds = array<i64: 1, 128>}, {pipeline_mode = #tpu.pipeline_mode<synchronous>, transform_indices = @transform_6, window_bounds = array<i64: 3, 128, 128>}, {pipeline_mode = #tpu.pipeline_mode<synchronous>, transform_indices = @transform_7, window_bounds = array<i64: 1, 128>}, {transform_indices = @transform_8, window_bounds = array<i64: 1, 8, 128>}]} {
    %0 = tpu.iota {dimensions = array<i32: 0>} : vector<128x1xi32>
    %c16_i32 = arith.constant 16 : i32
    %c0_i32 = arith.constant 0 : i32
    %1 = arith.cmpi eq, %c16_i32, %c0_i32 : i32
    %c1_i32 = arith.constant 1 : i32
    %2 = arith.select %1, %c1_i32, %c16_i32 : i32
    %3 = vector.broadcast %2 : i32 to vector<128x1xi32>
    %4 = arith.remsi %0, %3 : vector<128x1xi32>
    %c0_i32_0 = arith.constant 0 : i32
    %5 = vector.broadcast %c0_i32_0 : i32 to vector<128x1xi32>
    %6 = arith.cmpi ne, %4, %5 : vector<128x1xi32>
    %c0_i32_1 = arith.constant 0 : i32
    %7 = vector.broadcast %c0_i32_1 : i32 to vector<128x1xi32>
    %8 = arith.cmpi slt, %4, %7 : vector<128x1xi32>
    %c0_i32_2 = arith.constant 0 : i32
    %9 = arith.cmpi slt, %2, %c0_i32_2 : i32
    %10 = vector.broadcast %9 : i1 to vector<128x1xi1>
    %11 = vector.broadcast %10 : vector<128x1xi1> to vector<128x1xi1>
    %12 = arith.xori %8, %11 : vector<128x1xi1>
    %13 = arith.andi %12, %6 : vector<128x1xi1>
    %14 = vector.broadcast %2 : i32 to vector<128x1xi32>
    %15 = arith.addi %4, %14 : vector<128x1xi32>
    %16 = arith.select %13, %15, %4 : vector<128x1xi1>, vector<128x1xi32>
    %c0_i32_3 = arith.constant 0 : i32
    %17 = vector.broadcast %c0_i32_3 : i32 to vector<128x1xi32>
    %18 = arith.cmpi sgt, %16, %17 : vector<128x1xi32>
    %19 = arith.extui %18 : vector<128x1xi1> to vector<128x1xi32>
    %20 = arith.sitofp %19 : vector<128x1xi32> to vector<128x1xf32>
    %c15_i32 = arith.constant 15 : i32
    %21 = vector.broadcast %c15_i32 : i32 to vector<128x1xi32>
    %22 = arith.cmpi slt, %16, %21 : vector<128x1xi32>
    %23 = arith.extui %22 : vector<128x1xi1> to vector<128x1xi32>
    %24 = arith.sitofp %23 : vector<128x1xi32> to vector<128x1xf32>
    %c0 = arith.constant 0 : index
    %c0_4 = arith.constant 0 : index
    %25 = vector.load %arg1[%c0, %c0_4] : memref<128x4xf32, #tpu.memory_space<vmem>>, vector<128x4xf32>
    %26 = vector.extract_strided_slice %25 {offsets = [127, 0], sizes = [1, 4], strides = [1, 1]} : vector<128x4xf32> to vector<1x4xf32>
    %27 = vector.extract_strided_slice %25 {offsets = [0, 0], sizes = [127, 4], strides = [1, 1]} : vector<128x4xf32> to vector<127x4xf32>
    %28 = tpu.concatenate %26, %27 in 0 : vector<1x4xf32>, vector<127x4xf32> -> vector<128x4xf32>
    %29 = vector.broadcast %20 : vector<128x1xf32> to vector<128x4xf32>
    %30 = arith.mulf %29, %28 : vector<128x4xf32>
    %31 = vector.extract_strided_slice %25 {offsets = [1, 0], sizes = [127, 4], strides = [1, 1]} : vector<128x4xf32> to vector<127x4xf32>
    %32 = vector.extract_strided_slice %25 {offsets = [0, 0], sizes = [1, 4], strides = [1, 1]} : vector<128x4xf32> to vector<1x4xf32>
    %33 = tpu.concatenate %31, %32 in 0 : vector<127x4xf32>, vector<1x4xf32> -> vector<128x4xf32>
    %34 = vector.broadcast %24 : vector<128x1xf32> to vector<128x4xf32>
    %35 = arith.mulf %34, %33 : vector<128x4xf32>
    %c0_5 = arith.constant 0 : index
    %c0_6 = arith.constant 0 : index
    %c0_7 = arith.constant 0 : index
    %36 = vector.load %arg3[%c0_5, %c0_6, %c0_7] : memref<3x4x128xf32, #tpu.memory_space<vmem>>, vector<1x4x128xf32>
    %37 = vector.shape_cast %36 : vector<1x4x128xf32> to vector<4x128xf32>
    %cst = arith.constant dense<0.000000e+00> : vector<128x128xf32>
    %38 = tpu.matmul %30, %37, %cst {dimension_numbers = #tpu.dot_dimension_numbers<[1], [0], [0], [1], [0, 0, 1, 1], [], []>} : vector<128x4xf32>, vector<4x128xf32>, vector<128x128xf32> -> vector<128x128xf32>
    %c1 = arith.constant 1 : index
    %c0_8 = arith.constant 0 : index
    %c0_9 = arith.constant 0 : index
    %39 = vector.load %arg3[%c1, %c0_8, %c0_9] : memref<3x4x128xf32, #tpu.memory_space<vmem>>, vector<1x4x128xf32>
    %40 = vector.shape_cast %39 : vector<1x4x128xf32> to vector<4x128xf32>
    %cst_10 = arith.constant dense<0.000000e+00> : vector<128x128xf32>
    %41 = tpu.matmul %25, %40, %cst_10 {dimension_numbers = #tpu.dot_dimension_numbers<[1], [0], [0], [1], [0, 0, 1, 1], [], []>} : vector<128x4xf32>, vector<4x128xf32>, vector<128x128xf32> -> vector<128x128xf32>
    %42 = arith.addf %38, %41 : vector<128x128xf32>
    %c2 = arith.constant 2 : index
    %c0_11 = arith.constant 0 : index
    %c0_12 = arith.constant 0 : index
    %43 = vector.load %arg3[%c2, %c0_11, %c0_12] : memref<3x4x128xf32, #tpu.memory_space<vmem>>, vector<1x4x128xf32>
    %44 = vector.shape_cast %43 : vector<1x4x128xf32> to vector<4x128xf32>
    %cst_13 = arith.constant dense<0.000000e+00> : vector<128x128xf32>
    %45 = tpu.matmul %35, %44, %cst_13 {dimension_numbers = #tpu.dot_dimension_numbers<[1], [0], [0], [1], [0, 0, 1, 1], [], []>} : vector<128x4xf32>, vector<4x128xf32>, vector<128x128xf32> -> vector<128x128xf32>
    %46 = arith.addf %42, %45 : vector<128x128xf32>
    %c0_14 = arith.constant 0 : index
    %c0_15 = arith.constant 0 : index
    %47 = vector.load %arg4[%c0_14, %c0_15] : memref<1x128xf32, #tpu.memory_space<vmem>>, vector<1x128xf32>
    %48 = vector.broadcast %47 : vector<1x128xf32> to vector<128x128xf32>
    %49 = arith.addf %46, %48 : vector<128x128xf32>
    %cst_16 = arith.constant 5.000000e-01 : f32
    %50 = vector.broadcast %cst_16 : f32 to vector<128x128xf32>
    %51 = arith.mulf %50, %49 : vector<128x128xf32>
    %cst_17 = arith.constant 0.707106769 : f32
    %52 = vector.broadcast %cst_17 : f32 to vector<128x128xf32>
    %53 = arith.mulf %49, %52 : vector<128x128xf32>
    %54 = math.erf %53 : vector<128x128xf32>
    %cst_18 = arith.constant 1.000000e+00 : f32
    %55 = vector.broadcast %cst_18 : f32 to vector<128x128xf32>
    %56 = arith.addf %55, %54 : vector<128x128xf32>
    %57 = arith.mulf %51, %56 : vector<128x128xf32>
    %58 = vector.extract_strided_slice %57 {offsets = [127, 0], sizes = [1, 128], strides = [1, 1]} : vector<128x128xf32> to vector<1x128xf32>
    %59 = vector.extract_strided_slice %57 {offsets = [0, 0], sizes = [127, 128], strides = [1, 1]} : vector<128x128xf32> to vector<127x128xf32>
    %60 = tpu.concatenate %58, %59 in 0 : vector<1x128xf32>, vector<127x128xf32> -> vector<128x128xf32>
    %61 = vector.broadcast %20 : vector<128x1xf32> to vector<128x128xf32>
    %62 = arith.mulf %61, %60 : vector<128x128xf32>
    %63 = vector.extract_strided_slice %57 {offsets = [1, 0], sizes = [127, 128], strides = [1, 1]} : vector<128x128xf32> to vector<127x128xf32>
    %64 = vector.extract_strided_slice %57 {offsets = [0, 0], sizes = [1, 128], strides = [1, 1]} : vector<128x128xf32> to vector<1x128xf32>
    %65 = tpu.concatenate %63, %64 in 0 : vector<127x128xf32>, vector<1x128xf32> -> vector<128x128xf32>
    %66 = vector.broadcast %24 : vector<128x1xf32> to vector<128x128xf32>
    %67 = arith.mulf %66, %65 : vector<128x128xf32>
    %c0_19 = arith.constant 0 : index
    %c0_20 = arith.constant 0 : index
    %c0_21 = arith.constant 0 : index
    %68 = vector.load %arg5[%c0_19, %c0_20, %c0_21] : memref<3x128x128xf32, #tpu.memory_space<vmem>>, vector<1x128x128xf32>
    %69 = vector.shape_cast %68 : vector<1x128x128xf32> to vector<128x128xf32>
    %cst_22 = arith.constant dense<0.000000e+00> : vector<128x128xf32>
    %70 = tpu.matmul %62, %69, %cst_22 {dimension_numbers = #tpu.dot_dimension_numbers<[1], [0], [0], [1], [0, 0, 1, 1], [], []>} : vector<128x128xf32>, vector<128x128xf32>, vector<128x128xf32> -> vector<128x128xf32>
    %c1_23 = arith.constant 1 : index
    %c0_24 = arith.constant 0 : index
    %c0_25 = arith.constant 0 : index
    %71 = vector.load %arg5[%c1_23, %c0_24, %c0_25] : memref<3x128x128xf32, #tpu.memory_space<vmem>>, vector<1x128x128xf32>
    %72 = vector.shape_cast %71 : vector<1x128x128xf32> to vector<128x128xf32>
    %cst_26 = arith.constant dense<0.000000e+00> : vector<128x128xf32>
    %73 = tpu.matmul %57, %72, %cst_26 {dimension_numbers = #tpu.dot_dimension_numbers<[1], [0], [0], [1], [0, 0, 1, 1], [], []>} : vector<128x128xf32>, vector<128x128xf32>, vector<128x128xf32> -> vector<128x128xf32>
    %74 = arith.addf %70, %73 : vector<128x128xf32>
    %c2_27 = arith.constant 2 : index
    %c0_28 = arith.constant 0 : index
    %c0_29 = arith.constant 0 : index
    %75 = vector.load %arg5[%c2_27, %c0_28, %c0_29] : memref<3x128x128xf32, #tpu.memory_space<vmem>>, vector<1x128x128xf32>
    %76 = vector.shape_cast %75 : vector<1x128x128xf32> to vector<128x128xf32>
    %cst_30 = arith.constant dense<0.000000e+00> : vector<128x128xf32>
    %77 = tpu.matmul %67, %76, %cst_30 {dimension_numbers = #tpu.dot_dimension_numbers<[1], [0], [0], [1], [0, 0, 1, 1], [], []>} : vector<128x128xf32>, vector<128x128xf32>, vector<128x128xf32> -> vector<128x128xf32>
    %78 = arith.addf %74, %77 : vector<128x128xf32>
    %c0_31 = arith.constant 0 : index
    %c0_32 = arith.constant 0 : index
    %79 = vector.load %arg6[%c0_31, %c0_32] : memref<1x128xf32, #tpu.memory_space<vmem>>, vector<1x128xf32>
    %80 = vector.broadcast %79 : vector<1x128xf32> to vector<128x128xf32>
    %81 = arith.addf %78, %80 : vector<128x128xf32>
    %cst_33 = arith.constant 5.000000e-01 : f32
    %82 = vector.broadcast %cst_33 : f32 to vector<128x128xf32>
    %83 = arith.mulf %82, %81 : vector<128x128xf32>
    %cst_34 = arith.constant 0.707106769 : f32
    %84 = vector.broadcast %cst_34 : f32 to vector<128x128xf32>
    %85 = arith.mulf %81, %84 : vector<128x128xf32>
    %86 = math.erf %85 : vector<128x128xf32>
    %cst_35 = arith.constant 1.000000e+00 : f32
    %87 = vector.broadcast %cst_35 : f32 to vector<128x128xf32>
    %88 = arith.addf %87, %86 : vector<128x128xf32>
    %89 = arith.mulf %83, %88 : vector<128x128xf32>
    %90 = vector.extract_strided_slice %89 {offsets = [127, 0], sizes = [1, 128], strides = [1, 1]} : vector<128x128xf32> to vector<1x128xf32>
    %91 = vector.extract_strided_slice %89 {offsets = [0, 0], sizes = [127, 128], strides = [1, 1]} : vector<128x128xf32> to vector<127x128xf32>
    %92 = tpu.concatenate %90, %91 in 0 : vector<1x128xf32>, vector<127x128xf32> -> vector<128x128xf32>
    %93 = vector.broadcast %20 : vector<128x1xf32> to vector<128x128xf32>
    %94 = arith.mulf %93, %92 : vector<128x128xf32>
    %95 = vector.extract_strided_slice %89 {offsets = [1, 0], sizes = [127, 128], strides = [1, 1]} : vector<128x128xf32> to vector<127x128xf32>
    %96 = vector.extract_strided_slice %89 {offsets = [0, 0], sizes = [1, 128], strides = [1, 1]} : vector<128x128xf32> to vector<1x128xf32>
    %97 = tpu.concatenate %95, %96 in 0 : vector<127x128xf32>, vector<1x128xf32> -> vector<128x128xf32>
    %98 = vector.broadcast %24 : vector<128x1xf32> to vector<128x128xf32>
    %99 = arith.mulf %98, %97 : vector<128x128xf32>
    %c0_36 = arith.constant 0 : index
    %c0_37 = arith.constant 0 : index
    %c0_38 = arith.constant 0 : index
    %100 = vector.load %arg7[%c0_36, %c0_37, %c0_38] : memref<3x128x128xf32, #tpu.memory_space<vmem>>, vector<1x128x128xf32>
    %101 = vector.shape_cast %100 : vector<1x128x128xf32> to vector<128x128xf32>
    %cst_39 = arith.constant dense<0.000000e+00> : vector<128x128xf32>
    %102 = tpu.matmul %94, %101, %cst_39 {dimension_numbers = #tpu.dot_dimension_numbers<[1], [0], [0], [1], [0, 0, 1, 1], [], []>} : vector<128x128xf32>, vector<128x128xf32>, vector<128x128xf32> -> vector<128x128xf32>
    %c1_40 = arith.constant 1 : index
    %c0_41 = arith.constant 0 : index
    %c0_42 = arith.constant 0 : index
    %103 = vector.load %arg7[%c1_40, %c0_41, %c0_42] : memref<3x128x128xf32, #tpu.memory_space<vmem>>, vector<1x128x128xf32>
    %104 = vector.shape_cast %103 : vector<1x128x128xf32> to vector<128x128xf32>
    %cst_43 = arith.constant dense<0.000000e+00> : vector<128x128xf32>
    %105 = tpu.matmul %89, %104, %cst_43 {dimension_numbers = #tpu.dot_dimension_numbers<[1], [0], [0], [1], [0, 0, 1, 1], [], []>} : vector<128x128xf32>, vector<128x128xf32>, vector<128x128xf32> -> vector<128x128xf32>
    %106 = arith.addf %102, %105 : vector<128x128xf32>
    %c2_44 = arith.constant 2 : index
    %c0_45 = arith.constant 0 : index
    %c0_46 = arith.constant 0 : index
    %107 = vector.load %arg7[%c2_44, %c0_45, %c0_46] : memref<3x128x128xf32, #tpu.memory_space<vmem>>, vector<1x128x128xf32>
    %108 = vector.shape_cast %107 : vector<1x128x128xf32> to vector<128x128xf32>
    %cst_47 = arith.constant dense<0.000000e+00> : vector<128x128xf32>
    %109 = tpu.matmul %99, %108, %cst_47 {dimension_numbers = #tpu.dot_dimension_numbers<[1], [0], [0], [1], [0, 0, 1, 1], [], []>} : vector<128x128xf32>, vector<128x128xf32>, vector<128x128xf32> -> vector<128x128xf32>
    %110 = arith.addf %106, %109 : vector<128x128xf32>
    %c0_48 = arith.constant 0 : index
    %c0_49 = arith.constant 0 : index
    %111 = vector.load %arg8[%c0_48, %c0_49] : memref<1x128xf32, #tpu.memory_space<vmem>>, vector<1x128xf32>
    %112 = vector.broadcast %111 : vector<1x128xf32> to vector<128x128xf32>
    %113 = arith.addf %110, %112 : vector<128x128xf32>
    %cst_50 = arith.constant 5.000000e-01 : f32
    %114 = vector.broadcast %cst_50 : f32 to vector<128x128xf32>
    %115 = arith.mulf %114, %113 : vector<128x128xf32>
    %cst_51 = arith.constant 0.707106769 : f32
    %116 = vector.broadcast %cst_51 : f32 to vector<128x128xf32>
    %117 = arith.mulf %113, %116 : vector<128x128xf32>
    %118 = math.erf %117 : vector<128x128xf32>
    %cst_52 = arith.constant 1.000000e+00 : f32
    %119 = vector.broadcast %cst_52 : f32 to vector<128x128xf32>
    %120 = arith.addf %119, %118 : vector<128x128xf32>
    %121 = arith.mulf %115, %120 : vector<128x128xf32>
    %c0_53 = arith.constant 0 : index
    %c0_54 = arith.constant 0 : index
    %122 = vector.load %arg2[%c0_53, %c0_54] : memref<8x128xf32, #tpu.memory_space<vmem>>, vector<8x128xf32>
    %cst_55 = arith.constant dense<0.000000e+00> : vector<8x128xf32>
    %123 = tpu.matmul %122, %121, %cst_55 {dimension_numbers = #tpu.dot_dimension_numbers<[1], [0], [0], [1], [0, 0, 1, 1], [], []>} : vector<8x128xf32>, vector<128x128xf32>, vector<8x128xf32> -> vector<8x128xf32>
    %c0_56 = arith.constant 0 : index
    %c0_57 = arith.constant 0 : index
    %c0_58 = arith.constant 0 : index
    %124 = vector.load %arg9[%c0_56, %c0_57, %c0_58] : memref<1x8x128xf32, #tpu.memory_space<vmem>>, vector<1x8x128xf32>
    %125 = vector.shape_cast %124 : vector<1x8x128xf32> to vector<8x128xf32>
    %126 = vector.shape_cast %123 : vector<8x128xf32> to vector<1x8x128xf32>
    tpu.vector_store %arg9[%c0_56, %c0_57, %c0_58], %126 {strides = array<i32>} : memref<1x8x128xf32, #tpu.memory_space<vmem>>, vector<1x8x128xf32>,
    return
  }
  func.func @transform_0(%arg0: i32) -> (i32, i32) {
    %c0_i32 = arith.constant 0 : i32
    %c0_i32_0 = arith.constant 0 : i32
    return %arg0, %c0_i32 : i32, i32
  }
  func.func @transform_1(%arg0: i32) -> (i32, i32) {
    %c0_i32 = arith.constant 0 : i32
    %c0_i32_0 = arith.constant 0 : i32
    %c0_i32_1 = arith.constant 0 : i32
    return %c0_i32, %c0_i32_0 : i32, i32
  }
  func.func @transform_2(%arg0: i32) -> (i32, i32, i32) {
    %c0_i32 = arith.constant 0 : i32
    %c0_i32_0 = arith.constant 0 : i32
    %c0_i32_1 = arith.constant 0 : i32
    %c0_i32_2 = arith.constant 0 : i32
    return %c0_i32, %c0_i32_0, %c0_i32_1 : i32, i32, i32
  }
  func.func @transform_3(%arg0: i32) -> (i32, i32) {
    %c0_i32 = arith.constant 0 : i32
    %c0_i32_0 = arith.constant 0 : i32
    %c0_i32_1 = arith.constant 0 : i32
    return %c0_i32, %c0_i32_0 : i32, i32
  }
  func.func @transform_4(%arg0: i32) -> (i32, i32, i32) {
    %c0_i32 = arith.constant 0 : i32
    %c0_i32_0 = arith.constant 0 : i32
    %c0_i32_1 = arith.constant 0 : i32
    %c0_i32_2 = arith.constant 0 : i32
    return %c0_i32, %c0_i32_0, %c0_i32_1 : i32, i32, i32
  }
  func.func @transform_5(%arg0: i32) -> (i32, i32) {
    %c0_i32 = arith.constant 0 : i32
    %c0_i32_0 = arith.constant 0 : i32
    %c0_i32_1 = arith.constant 0 : i32
    return %c0_i32, %c0_i32_0 : i32, i32
  }
  func.func @transform_6(%arg0: i32) -> (i32, i32, i32) {
    %c0_i32 = arith.constant 0 : i32
    %c0_i32_0 = arith.constant 0 : i32
    %c0_i32_1 = arith.constant 0 : i32
    %c0_i32_2 = arith.constant 0 : i32
    return %c0_i32, %c0_i32_0, %c0_i32_1 : i32, i32, i32
  }
  func.func @transform_7(%arg0: i32) -> (i32, i32) {
    %c0_i32 = arith.constant 0 : i32
    %c0_i32_0 = arith.constant 0 : i32
    %c0_i32_1 = arith.constant 0 : i32
    return %c0_i32, %c0_i32_0 : i32, i32
  }
  func.func @transform_8(%arg0: i32) -> (i32, i32, i32) {
    %c0_i32 = arith.constant 0 : i32
    %c0_i32_0 = arith.constant 0 : i32
    %c0_i32_1 = arith.constant 0 : i32
    return %arg0, %c0_i32, %c0_i32_0 : i32, i32, i32
  }
}

</mosaic_0001>

<llo_original>
// kernel: tpu_custom_call.1
$region0: #{tpu_custom_call.1}
  #allocation0 [shape = 'u32[]', space=smem, size = 0x4, offset = 0x4, fixed_abs, tag = 'smem constant byte address 0x4 - core index']
  #allocation1 [shape = 'u32[144,128]{1,0:T(1,128)}', space=vmem, size = 0x12000, scoped, tag = 'internal scratch']
  %s0 = inlined_call_operand.vmem [shape: f32[128,4], index: 0, kind: input, shape index: {}]
  %s1 = inlined_call_operand.vmem [shape: f32[8,128], index: 1, kind: input, shape index: {}]
  %s2 = inlined_call_operand.vmem [shape: f32[3,4,128], index: 2, kind: input, shape index: {}]
  %s3 = inlined_call_operand.vmem [shape: f32[1,128], index: 3, kind: input, shape index: {}]
  %s4 = inlined_call_operand.hbm [shape: f32[3,128,128], index: 4, kind: input, shape index: {}]
  %s5 = inlined_call_operand.vmem [shape: f32[1,128], index: 5, kind: input, shape index: {}]
  %s6 = inlined_call_operand.hbm [shape: f32[3,128,128], index: 6, kind: input, shape index: {}]
  %s7 = inlined_call_operand.vmem [shape: f32[1,128], index: 7, kind: input, shape index: {}]
  %s8 = inlined_call_operand.hbm [shape: f32[1,8,128], index: 8, kind: output, shape index: {}]
  %s9 = sld [smem:[#allocation0]]
  $region50: #{tpu_custom_call.1} parent=0
    _
  %s11 = ssub.s32 1, %s9
  %s12 = scalar_select 0, %s11, %s9
  $region1: #{tpu_custom_call.1} parent=0
    #allocation2 [shape = 'u8[196608]{0}', space=vmem, size = 0x30000, scoped, tag = 'input window, operand 4, single buffered']
    #allocation3 [shape = 's32[1]{0}', space=sflag, size = 0x4, scoped, tag = 'scoped memory for tpu_custom_call.1']
    #allocation4 [shape = 's32[1]{0}', space=sflag, size = 0x4, scoped, tag = 'scoped memory for tpu_custom_call.1']
    #allocation5 [shape = 'u8[196608]{0}', space=vmem, size = 0x30000, scoped, tag = 'input window, operand 6, single buffered']
    #allocation6 [shape = 's32[1]{0}', space=sflag, size = 0x4, scoped, tag = 'scoped memory for tpu_custom_call.1']
    #allocation7 [shape = 'u8[4096]{0}', space=vmem, size = 0x1000, scoped, tag = 'output window, operand 0, single buffered']
    %13 = vsyncpa [#allocation3], 0
    %14 = vsyncpa [#allocation6], 0
    %15 = vsyncpa [#allocation4], 0
    // Predicated region
    $region2: #{tpu_custom_call.1} parent=1 // pred_check
      _
    $region3: #{tpu_custom_call.1} parent=1 // pred_check_branch
      %17 = sbr.rel (0) target = $region5
    $region4: #{tpu_custom_call.1} parent=1 // pred_region
      _
    $region5: #{tpu_custom_call.1} parent=1 // pred_fallthru
      _
    // Predicated region
    $region6: #{tpu_custom_call.1} parent=1 // pred_check
      _
    $region7: #{tpu_custom_call.1} parent=1 // pred_check_branch
      %19 = sbr.rel (0) target = $region9
    $region8: #{tpu_custom_call.1} parent=1 // pred_region
      _
    $region9: #{tpu_custom_call.1} parent=1 // pred_fallthru
      _
    // Predicated region
    $region10: #{tpu_custom_call.1} parent=1 // pred_check
      _
    $region11: #{tpu_custom_call.1} parent=1 // pred_check_branch
      %21 = sbr.rel (0) target = $region13
    $region12: #{tpu_custom_call.1} parent=1 // pred_region
      _
    $region13: #{tpu_custom_call.1} parent=1 // pred_fallthru
      _
    // Predicated region
    $region14: #{tpu_custom_call.1} parent=1 // pred_check
      _
    $region15: #{tpu_custom_call.1} parent=1 // pred_check_branch
      %23 = sbr.rel (0) target = $region17
    $region16: #{tpu_custom_call.1} parent=1 // pred_region
      _
    $region17: #{tpu_custom_call.1} parent=1 // pred_fallthru
      _
    // Predicated region
    $region18: #{tpu_custom_call.1} parent=1 // pred_check
      _
    $region19: #{tpu_custom_call.1} parent=1 // pred_check_branch
      %25 = sbr.rel (0) target = $region21
    $region20: #{tpu_custom_call.1} parent=1 // pred_region
      %s27 = ssub.s32 6144, 6144
      %28 = vsyncadd [#allocation3], %s27
      %s29 = sshll.u32 [#allocation2], 4
      %s30 = int_to_ptr.vmem [resolvable:$true] %s29
      %35 = dma.hbm_to_vmem [thread:$0]  %s4, 6144, %s30, [#allocation3], 128, 128, 8
    $region21: #{tpu_custom_call.1} parent=1 // pred_fallthru
      _
    // Predicated region
    $region22: #{tpu_custom_call.1} parent=1 // pred_check
      _
    $region23: #{tpu_custom_call.1} parent=1 // pred_check_branch
      %37 = sbr.rel (0) target = $region25
    $region24: #{tpu_custom_call.1} parent=1 // pred_region
      _
    $region25: #{tpu_custom_call.1} parent=1 // pred_fallthru
      _
    // Predicated region
    $region26: #{tpu_custom_call.1} parent=1 // pred_check
      _
    $region27: #{tpu_custom_call.1} parent=1 // pred_check_branch
      %39 = sbr.rel (0) target = $region29
    $region28: #{tpu_custom_call.1} parent=1 // pred_region
      %s41 = ssub.s32 6144, 6144
      %42 = vsyncadd [#allocation6], %s41
      %s43 = sshll.u32 [#allocation5], 4
      %s44 = int_to_ptr.vmem [resolvable:$true] %s43
      %49 = dma.hbm_to_vmem [thread:$0]  %s6, 6144, %s44, [#allocation6], 128, 128, 8
    $region29: #{tpu_custom_call.1} parent=1 // pred_fallthru
      _
    // Predicated region
    $region30: #{tpu_custom_call.1} parent=1 // pred_check
      _
    $region31: #{tpu_custom_call.1} parent=1 // pred_check_branch
      %51 = sbr.rel (0) target = $region33
    $region32: #{tpu_custom_call.1} parent=1 // pred_region
      _
    $region33: #{tpu_custom_call.1} parent=1 // pred_fallthru
      _
    // Predicated region
    $region34: #{tpu_custom_call.1} parent=1 // pred_check
      _
    $region35: #{tpu_custom_call.1} parent=1 // pred_check_branch
      %53 = sbr.rel (0) target = $region37
    $region36: #{tpu_custom_call.1} parent=1 // pred_region
      %54 = dma.done [#allocation3], 6144
    $region37: #{tpu_custom_call.1} parent=1 // pred_fallthru
      _
    // Predicated region
    $region38: #{tpu_custom_call.1} parent=1 // pred_check
      _
    $region39: #{tpu_custom_call.1} parent=1 // pred_check_branch
      %56 = sbr.rel (0) target = $region41
    $region40: #{tpu_custom_call.1} parent=1 // pred_region
      %57 = dma.done [#allocation6], 6144
    $region41: #{tpu_custom_call.1} parent=1 // pred_fallthru
      _
    %v58 = vlaneseq
    %v59 = vshrl.u32 %v58, 7
    %v60 = vadd.s32 %v59, 8
    %v61 = vadd.s32 %v59, 16
    %v62 = vadd.s32 %v59, 24
    %v63 = vadd.s32 %v59, 32
    %v64 = vadd.s32 %v59, 40
    %v65 = vadd.s32 %v59, 48
    %v66 = vadd.s32 %v59, 56
    %v67 = vadd.s32 %v59, 64
    %v68 = vadd.s32 %v59, 72
    %v69 = vadd.s32 %v59, 80
    %v70 = vadd.s32 %v59, 88
    %v71 = vadd.s32 %v59, 96
    %v72 = vadd.s32 %v59, 104
    %v73 = vadd.s32 %v59, 112
    %v74 = vadd.s32 %v59, 120
    %vm75 = vcmp.lt.s32.totalorder %v59, 0
    %v76 = vsub.s32 0, %v59
    %v77 = vsel %vm75, %v76, %v59
    %v78 = vshrl.u32 %v77, 4
    %v79 = vand.u32 %v77, 15
    %v80 = vsub.s32 0, %v79
    %v81 = vsel %vm75, %v80, %v79
    %vm82 = vcmp.lt.s32.totalorder %v60, 0
    %v83 = vsub.s32 0, %v60
    %v84 = vsel %vm82, %v83, %v60
    %v85 = vshrl.u32 %v84, 4
    %v86 = vand.u32 %v84, 15
    %v87 = vsub.s32 0, %v86
    %v88 = vsel %vm82, %v87, %v86
    %vm89 = vcmp.lt.s32.totalorder %v61, 0
    %v90 = vsub.s32 0, %v61
    %v91 = vsel %vm89, %v90, %v61
    %v92 = vshrl.u32 %v91, 4
    %v93 = vand.u32 %v91, 15
    %v94 = vsub.s32 0, %v93
    %v95 = vsel %vm89, %v94, %v93
    %vm96 = vcmp.lt.s32.totalorder %v62, 0
    %v97 = vsub.s32 0, %v62
    %v98 = vsel %vm96, %v97, %v62
    %v99 = vshrl.u32 %v98, 4
    %v100 = vand.u32 %v98, 15
    %v101 = vsub.s32 0, %v100
    %v102 = vsel %vm96, %v101, %v100
    %vm103 = vcmp.lt.s32.totalorder %v63, 0
    %v104 = vsub.s32 0, %v63
    %v105 = vsel %vm103, %v104, %v63
    %v106 = vshrl.u32 %v105, 4
    %v107 = vand.u32 %v105, 15
    %v108 = vsub.s32 0, %v107
    %v109 = vsel %vm103, %v108, %v107
    %vm110 = vcmp.lt.s32.totalorder %v64, 0
    %v111 = vsub.s32 0, %v64
    %v112 = vsel %vm110, %v111, %v64
    %v113 = vshrl.u32 %v112, 4
    %v114 = vand.u32 %v112, 15
    %v115 = vsub.s32 0, %v114
    %v116 = vsel %vm110, %v115, %v114
    %vm117 = vcmp.lt.s32.totalorder %v65, 0
    %v118 = vsub.s32 0, %v65
    %v119 = vsel %vm117, %v118, %v65
    %v120 = vshrl.u32 %v119, 4
    %v121 = vand.u32 %v119, 15
    %v122 = vsub.s32 0, %v121
    %v123 = vsel %vm117, %v122, %v121
    %vm124 = vcmp.lt.s32.totalorder %v66, 0
    %v125 = vsub.s32 0, %v66
    %v126 = vsel %vm124, %v125, %v66
    %v127 = vshrl.u32 %v126, 4
    %v128 = vand.u32 %v126, 15
    %v129 = vsub.s32 0, %v128
    %v130 = vsel %vm124, %v129, %v128
    %vm131 = vcmp.lt.s32.totalorder %v67, 0
    %v132 = vsub.s32 0, %v67
    %v133 = vsel %vm131, %v132, %v67
    %v134 = vshrl.u32 %v133, 4
    %v135 = vand.u32 %v133, 15
    %v136 = vsub.s32 0, %v135
    %v137 = vsel %vm131, %v136, %v135
    %vm138 = vcmp.lt.s32.totalorder %v68, 0
    %v139 = vsub.s32 0, %v68
    %v140 = vsel %vm138, %v139, %v68
    %v141 = vshrl.u32 %v140, 4
    %v142 = vand.u32 %v140, 15
    %v143 = vsub.s32 0, %v142
    %v144 = vsel %vm138, %v143, %v142
    %vm145 = vcmp.lt.s32.totalorder %v69, 0
    %v146 = vsub.s32 0, %v69
    %v147 = vsel %vm145, %v146, %v69
    %v148 = vshrl.u32 %v147, 4
    %v149 = vand.u32 %v147, 15
    %v150 = vsub.s32 0, %v149
    %v151 = vsel %vm145, %v150, %v149
    %vm152 = vcmp.lt.s32.totalorder %v70, 0
    %v153 = vsub.s32 0, %v70
    %v154 = vsel %vm152, %v153, %v70
    %v155 = vshrl.u32 %v154, 4
    %v156 = vand.u32 %v154, 15
    %v157 = vsub.s32 0, %v156
    %v158 = vsel %vm152, %v157, %v156
    %vm159 = vcmp.lt.s32.totalorder %v71, 0
    %v160 = vsub.s32 0, %v71
    %v161 = vsel %vm159, %v160, %v71
    %v162 = vshrl.u32 %v161, 4
    %v163 = vand.u32 %v161, 15
    %v164 = vsub.s32 0, %v163
    %v165 = vsel %vm159, %v164, %v163
    %vm166 = vcmp.lt.s32.totalorder %v72, 0
    %v167 = vsub.s32 0, %v72
    %v168 = vsel %vm166, %v167, %v72
    %v169 = vshrl.u32 %v168, 4
    %v170 = vand.u32 %v168, 15
    %v171 = vsub.s32 0, %v170
    %v172 = vsel %vm166, %v171, %v170
    %vm173 = vcmp.lt.s32.totalorder %v73, 0
    %v174 = vsub.s32 0, %v73
    %v175 = vsel %vm173, %v174, %v73
    %v176 = vshrl.u32 %v175, 4
    %v177 = vand.u32 %v175, 15
    %v178 = vsub.s32 0, %v177
    %v179 = vsel %vm173, %v178, %v177
    %vm180 = vcmp.lt.s32.totalorder %v74, 0
    %v181 = vsub.s32 0, %v74
    %v182 = vsel %vm180, %v181, %v74
    %v183 = vshrl.u32 %v182, 4
    %v184 = vand.u32 %v182, 15
    %v185 = vsub.s32 0, %v184
    %v186 = vsel %vm180, %v185, %v184
    %vm187 = vcmp.ne.s32.totalorder %v81, 0
    %vm188 = vcmp.ne.s32.totalorder %v88, 0
    %vm189 = vcmp.ne.s32.totalorder %v95, 0
    %vm190 = vcmp.ne.s32.totalorder %v102, 0
    %vm191 = vcmp.ne.s32.totalorder %v109, 0
    %vm192 = vcmp.ne.s32.totalorder %v116, 0
    %vm193 = vcmp.ne.s32.totalorder %v123, 0
    %vm194 = vcmp.ne.s32.totalorder %v130, 0
    %vm195 = vcmp.ne.s32.totalorder %v137, 0
    %vm196 = vcmp.ne.s32.totalorder %v144, 0
    %vm197 = vcmp.ne.s32.totalorder %v151, 0
    %vm198 = vcmp.ne.s32.totalorder %v158, 0
    %vm199 = vcmp.ne.s32.totalorder %v165, 0
    %vm200 = vcmp.ne.s32.totalorder %v172, 0
    %vm201 = vcmp.ne.s32.totalorder %v179, 0
    %vm202 = vcmp.ne.s32.totalorder %v186, 0
    %vm203 = vcmp.lt.s32.totalorder %v81, 0
    %vm204 = vcmp.lt.s32.totalorder %v88, 0
    %vm205 = vcmp.lt.s32.totalorder %v95, 0
    %vm206 = vcmp.lt.s32.totalorder %v102, 0
    %vm207 = vcmp.lt.s32.totalorder %v109, 0
    %vm208 = vcmp.lt.s32.totalorder %v116, 0
    %vm209 = vcmp.lt.s32.totalorder %v123, 0
    %vm210 = vcmp.lt.s32.totalorder %v130, 0
    %vm211 = vcmp.lt.s32.totalorder %v137, 0
    %vm212 = vcmp.lt.s32.totalorder %v144, 0
    %vm213 = vcmp.lt.s32.totalorder %v151, 0
    %vm214 = vcmp.lt.s32.totalorder %v158, 0
    %vm215 = vcmp.lt.s32.totalorder %v165, 0
    %vm216 = vcmp.lt.s32.totalorder %v172, 0
    %vm217 = vcmp.lt.s32.totalorder %v179, 0
    %vm218 = vcmp.lt.s32.totalorder %v186, 0
    %vm219 = vmand %vm203, %vm187
    %vm220 = vmand %vm204, %vm188
    %vm221 = vmand %vm205, %vm189
    %vm222 = vmand %vm206, %vm190
    %vm223 = vmand %vm207, %vm191
    %vm224 = vmand %vm208, %vm192
    %vm225 = vmand %vm209, %vm193
    %vm226 = vmand %vm210, %vm194
    %vm227 = vmand %vm211, %vm195
    %vm228 = vmand %vm212, %vm196
    %vm229 = vmand %vm213, %vm197
    %vm230 = vmand %vm214, %vm198
    %vm231 = vmand %vm215, %vm199
    %vm232 = vmand %vm216, %vm200
    %vm233 = vmand %vm217, %vm201
    %vm234 = vmand %vm218, %vm202
    %v235 = vadd.s32 %v81, 16
    %v236 = vadd.s32 %v88, 16
    %v237 = vadd.s32 %v95, 16
    %v238 = vadd.s32 %v102, 16
    %v239 = vadd.s32 %v109, 16
    %v240 = vadd.s32 %v116, 16
    %v241 = vadd.s32 %v123, 16
    %v242 = vadd.s32 %v130, 16
    %v243 = vadd.s32 %v137, 16
    %v244 = vadd.s32 %v144, 16
    %v245 = vadd.s32 %v151, 16
    %v246 = vadd.s32 %v158, 16
    %v247 = vadd.s32 %v165, 16
    %v248 = vadd.s32 %v172, 16
    %v249 = vadd.s32 %v179, 16
    %v250 = vadd.s32 %v186, 16
    %v251 = vsel %vm219, %v235, %v81
    %v252 = vsel %vm220, %v236, %v88
    %v253 = vsel %vm221, %v237, %v95
    %v254 = vsel %vm222, %v238, %v102
    %v255 = vsel %vm223, %v239, %v109
    %v256 = vsel %vm224, %v240, %v116
    %v257 = vsel %vm225, %v241, %v123
    %v258 = vsel %vm226, %v242, %v130
    %v259 = vsel %vm227, %v243, %v137
    %v260 = vsel %vm228, %v244, %v144
    %v261 = vsel %vm229, %v245, %v151
    %v262 = vsel %vm230, %v246, %v158
    %v263 = vsel %vm231, %v247, %v165
    %v264 = vsel %vm232, %v248, %v172
    %v265 = vsel %vm233, %v249, %v179
    %v266 = vsel %vm234, %v250, %v186
    %vm267 = vcmp.gt.s32.totalorder %v251, 0
    %vm268 = vcmp.gt.s32.totalorder %v252, 0
    %vm269 = vcmp.gt.s32.totalorder %v253, 0
    %vm270 = vcmp.gt.s32.totalorder %v254, 0
    %vm271 = vcmp.gt.s32.totalorder %v255, 0
    %vm272 = vcmp.gt.s32.totalorder %v256, 0
    %vm273 = vcmp.gt.s32.totalorder %v257, 0
    %vm274 = vcmp.gt.s32.totalorder %v258, 0
    %vm275 = vcmp.gt.s32.totalorder %v259, 0
    %vm276 = vcmp.gt.s32.totalorder %v260, 0
    %vm277 = vcmp.gt.s32.totalorder %v261, 0
    %vm278 = vcmp.gt.s32.totalorder %v262, 0
    %vm279 = vcmp.gt.s32.totalorder %v263, 0
    %vm280 = vcmp.gt.s32.totalorder %v264, 0
    %vm281 = vcmp.gt.s32.totalorder %v265, 0
    %vm282 = vcmp.gt.s32.totalorder %v266, 0
    %v283 = vsel %vm267, 1, 0
    %v284 = vsel %vm268, 1, 0
    %v285 = vsel %vm269, 1, 0
    %v286 = vsel %vm270, 1, 0
    %v287 = vsel %vm271, 1, 0
    %v288 = vsel %vm272, 1, 0
    %v289 = vsel %vm273, 1, 0
    %v290 = vsel %vm274, 1, 0
    %v291 = vsel %vm275, 1, 0
    %v292 = vsel %vm276, 1, 0
    %v293 = vsel %vm277, 1, 0
    %v294 = vsel %vm278, 1, 0
    %v295 = vsel %vm279, 1, 0
    %v296 = vsel %vm280, 1, 0
    %v297 = vsel %vm281, 1, 0
    %v298 = vsel %vm282, 1, 0
    %v299 = vcvt.s32.f32 %v283
    %v300 = vcvt.s32.f32 %v284
    %v301 = vcvt.s32.f32 %v285
    %v302 = vcvt.s32.f32 %v286
    %v303 = vcvt.s32.f32 %v287
    %v304 = vcvt.s32.f32 %v288
    %v305 = vcvt.s32.f32 %v289
    %v306 = vcvt.s32.f32 %v290
    %v307 = vcvt.s32.f32 %v291
    %v308 = vcvt.s32.f32 %v292
    %v309 = vcvt.s32.f32 %v293
    %v310 = vcvt.s32.f32 %v294
    %v311 = vcvt.s32.f32 %v295
    %v312 = vcvt.s32.f32 %v296
    %v313 = vcvt.s32.f32 %v297
    %v314 = vcvt.s32.f32 %v298
    %vm315 = vcmp.lt.s32.totalorder %v251, 15
    %vm316 = vcmp.lt.s32.totalorder %v252, 15
    %vm317 = vcmp.lt.s32.totalorder %v253, 15
    %vm318 = vcmp.lt.s32.totalorder %v254, 15
    %vm319 = vcmp.lt.s32.totalorder %v255, 15
    %vm320 = vcmp.lt.s32.totalorder %v256, 15
    %vm321 = vcmp.lt.s32.totalorder %v257, 15
    %vm322 = vcmp.lt.s32.totalorder %v258, 15
    %vm323 = vcmp.lt.s32.totalorder %v259, 15
    %vm324 = vcmp.lt.s32.totalorder %v260, 15
    %vm325 = vcmp.lt.s32.totalorder %v261, 15
    %vm326 = vcmp.lt.s32.totalorder %v262, 15
    %vm327 = vcmp.lt.s32.totalorder %v263, 15
    %vm328 = vcmp.lt.s32.totalorder %v264, 15
    %vm329 = vcmp.lt.s32.totalorder %v265, 15
    %vm330 = vcmp.lt.s32.totalorder %v266, 15
    %v331 = vsel %vm315, 1, 0
    %v332 = vsel %vm316, 1, 0
    %v333 = vsel %vm317, 1, 0
    %v334 = vsel %vm318, 1, 0
    %v335 = vsel %vm319, 1, 0
    %v336 = vsel %vm320, 1, 0
    %v337 = vsel %vm321, 1, 0
    %v338 = vsel %vm322, 1, 0
    %v339 = vsel %vm323, 1, 0
    %v340 = vsel %vm324, 1, 0
    %v341 = vsel %vm325, 1, 0
    %v342 = vsel %vm326, 1, 0
    %v343 = vsel %vm327, 1, 0
    %v344 = vsel %vm328, 1, 0
    %v345 = vsel %vm329, 1, 0
    %v346 = vsel %vm330, 1, 0
    %v347 = vcvt.s32.f32 %v331
    %v348 = vcvt.s32.f32 %v332
    %v349 = vcvt.s32.f32 %v333
    %v350 = vcvt.s32.f32 %v334
    %v351 = vcvt.s32.f32 %v335
    %v352 = vcvt.s32.f32 %v336
    %v353 = vcvt.s32.f32 %v337
    %v354 = vcvt.s32.f32 %v338
    %v355 = vcvt.s32.f32 %v339
    %v356 = vcvt.s32.f32 %v340
    %v357 = vcvt.s32.f32 %v341
    %v358 = vcvt.s32.f32 %v342
    %v359 = vcvt.s32.f32 %v343
    %v360 = vcvt.s32.f32 %v344
    %v361 = vcvt.s32.f32 %v345
    %v362 = vcvt.s32.f32 %v346
    %v363 = vld [vmem:[%s0] sm:$0xff]
    %v364 = vld [vmem:[%s0 + $0x8] sm:$0xff]
    %v365 = vld [vmem:[%s0 + $0x10] sm:$0xff]
    %v366 = vld [vmem:[%s0 + $0x18] sm:$0xff]
    %v367 = vld [vmem:[%s0 + $0x20] sm:$0xff]
    %v368 = vld [vmem:[%s0 + $0x28] sm:$0xff]
    %v369 = vld [vmem:[%s0 + $0x30] sm:$0xff]
    %v370 = vld [vmem:[%s0 + $0x38] sm:$0xff]
    %v371 = vld [vmem:[%s0 + $0x40] sm:$0xff]
    %v372 = vld [vmem:[%s0 + $0x48] sm:$0xff]
    %v373 = vld [vmem:[%s0 + $0x50] sm:$0xff]
    %v374 = vld [vmem:[%s0 + $0x58] sm:$0xff]
    %v375 = vld [vmem:[%s0 + $0x60] sm:$0xff]
    %v376 = vld [vmem:[%s0 + $0x68] sm:$0xff]
    %v377 = vld [vmem:[%s0 + $0x70] sm:$0xff]
    %v378 = vld [vmem:[%s0 + $0x78] sm:$0xff]
    %v380 = vrot.slane %v378, 7
    %vm397 = vcmask 1040384
    %v398 = vrot.slane %v363, 7
    %v399 = vrot.slane %v364, 7
    %v400 = vsel %vm397, %v398, %v399
    %v401 = vrot.slane %v365, 7
    %v402 = vsel %vm397, %v399, %v401
    %v403 = vrot.slane %v366, 7
    %v404 = vsel %vm397, %v401, %v403
    %v405 = vrot.slane %v367, 7
    %v406 = vsel %vm397, %v403, %v405
    %v407 = vrot.slane %v368, 7
    %v408 = vsel %vm397, %v405, %v407
    %v409 = vrot.slane %v369, 7
    %v410 = vsel %vm397, %v407, %v409
    %v411 = vrot.slane %v370, 7
    %v412 = vsel %vm397, %v409, %v411
    %v413 = vrot.slane %v371, 7
    %v414 = vsel %vm397, %v411, %v413
    %v415 = vrot.slane %v372, 7
    %v416 = vsel %vm397, %v413, %v415
    %v417 = vrot.slane %v373, 7
    %v418 = vsel %vm397, %v415, %v417
    %v419 = vrot.slane %v374, 7
    %v420 = vsel %vm397, %v417, %v419
    %v421 = vrot.slane %v375, 7
    %v422 = vsel %vm397, %v419, %v421
    %v423 = vrot.slane %v376, 7
    %v424 = vsel %vm397, %v421, %v423
    %v425 = vrot.slane %v377, 7
    %v426 = vsel %vm397, %v423, %v425
    %v427 = vsel %vm397, %v425, %v380
    %v444 = vsel %vm397, %v380, %v398
    %v445 = vmul.f32 %v299, %v444
    %v446 = vmul.f32 %v300, %v400
    %v447 = vmul.f32 %v301, %v402
    %v448 = vmul.f32 %v302, %v404
    %v449 = vmul.f32 %v303, %v406
    %v450 = vmul.f32 %v304, %v408
    %v451 = vmul.f32 %v305, %v410
    %v452 = vmul.f32 %v306, %v412
    %v453 = vmul.f32 %v307, %v414
    %v454 = vmul.f32 %v308, %v416
    %v455 = vmul.f32 %v309, %v418
    %v456 = vmul.f32 %v310, %v420
    %v457 = vmul.f32 %v311, %v422
    %v458 = vmul.f32 %v312, %v424
    %v459 = vmul.f32 %v313, %v426
    %v460 = vmul.f32 %v314, %v427
    %vm461 = vcmask 1046528
    %v462 = vrot.slane %v363, 1
    %v463 = vrot.slane %v364, 1
    %v464 = vsel %vm461, %v462, %v463
    %v465 = vrot.slane %v365, 1
    %v466 = vsel %vm461, %v463, %v465
    %v467 = vrot.slane %v366, 1
    %v468 = vsel %vm461, %v465, %v467
    %v469 = vrot.slane %v367, 1
    %v470 = vsel %vm461, %v467, %v469
    %v471 = vrot.slane %v368, 1
    %v472 = vsel %vm461, %v469, %v471
    %v473 = vrot.slane %v369, 1
    %v474 = vsel %vm461, %v471, %v473
    %v475 = vrot.slane %v370, 1
    %v476 = vsel %vm461, %v473, %v475
    %v477 = vrot.slane %v371, 1
    %v478 = vsel %vm461, %v475, %v477
    %v479 = vrot.slane %v372, 1
    %v480 = vsel %vm461, %v477, %v479
    %v481 = vrot.slane %v373, 1
    %v482 = vsel %vm461, %v479, %v481
    %v483 = vrot.slane %v374, 1
    %v484 = vsel %vm461, %v481, %v483
    %v485 = vrot.slane %v375, 1
    %v486 = vsel %vm461, %v483, %v485
    %v487 = vrot.slane %v376, 1
    %v488 = vsel %vm461, %v485, %v487
    %v489 = vrot.slane %v377, 1
    %v490 = vsel %vm461, %v487, %v489
    %v491 = vrot.slane %v378, 1
    %v492 = vsel %vm461, %v489, %v491
    %v510 = vsel %vm461, %v491, %v462
    %v511 = vmul.f32 %v347, %v464
    %v512 = vmul.f32 %v348, %v466
    %v513 = vmul.f32 %v349, %v468
    %v514 = vmul.f32 %v350, %v470
    %v515 = vmul.f32 %v351, %v472
    %v516 = vmul.f32 %v352, %v474
    %v517 = vmul.f32 %v353, %v476
    %v518 = vmul.f32 %v354, %v478
    %v519 = vmul.f32 %v355, %v480
    %v520 = vmul.f32 %v356, %v482
    %v521 = vmul.f32 %v357, %v484
    %v522 = vmul.f32 %v358, %v486
    %v523 = vmul.f32 %v359, %v488
    %v524 = vmul.f32 %v360, %v490
    %v525 = vmul.f32 %v361, %v492
    %v526 = vmul.f32 %v362, %v510
    %v527 = vld [vmem:[%s2] sm:$0xf]
    %s528 = scalar_lea.vmem %s2, 4
    %v529 = vld [vmem:[%s528] sm:$0xf]
    %vm530 = vcmask 31744
    %v531 = vsel %vm530, %v363, 0
    %v533 = vsel %vm530, %v364, 0
    %v535 = vsel %vm530, %v365, 0
    %v537 = vsel %vm530, %v366, 0
    %v539 = vsel %vm530, %v367, 0
    %v541 = vsel %vm530, %v368, 0
    %v543 = vsel %vm530, %v369, 0
    %v545 = vsel %vm530, %v370, 0
    %v547 = vsel %vm530, %v371, 0
    %v549 = vsel %vm530, %v372, 0
    %v551 = vsel %vm530, %v373, 0
    %v553 = vsel %vm530, %v374, 0
    %v555 = vsel %vm530, %v375, 0
    %v557 = vsel %vm530, %v376, 0
    %v559 = vsel %vm530, %v377, 0
    %v561 = vsel %vm530, %v378, 0
    %vm563 = vcmask 1043456
    %v565 = vsel %vm563, %v529, 0
    %567 = vmatprep.subr.mxu0 0.0
    %568 = vmatpush1.msra.mxu0 %v565
    %569 = vmatprep.subr.mxu0 0.0
    %570 = vmatpush1.msra.mxu0 0.0
    %571 = vmatprep.subr.mxu0 0.0
    %572 = vmatpush1.msra.mxu0 0.0
    %573 = vmatprep.subr.mxu0 0.0
    %574 = vmatpush1.msra.mxu0 0.0
    %575 = vmatprep.subr.mxu0 0.0
    %576 = vmatpush1.msra.mxu0 0.0
    %577 = vmatprep.subr.mxu0 0.0
    %578 = vmatpush1.msra.mxu0 0.0
    %579 = vmatprep.subr.mxu0 0.0
    %580 = vmatpush1.msra.mxu0 0.0
    %581 = vmatprep.subr.mxu0 0.0
    %582 = vmatpush1.msra.mxu0 0.0
    %583 = vmatprep.subr.mxu0 0.0
    %584 = vmatpush1.msra.mxu0 0.0
    %585 = vmatprep.subr.mxu0 0.0
    %586 = vmatpush1.msra.mxu0 0.0
    %587 = vmatprep.subr.mxu0 0.0
    %588 = vmatpush1.msra.mxu0 0.0
    %589 = vmatprep.subr.mxu0 0.0
    %590 = vmatpush1.msra.mxu0 0.0
    %591 = vmatprep.subr.mxu0 0.0
    %592 = vmatpush1.msra.mxu0 0.0
    %593 = vmatprep.subr.mxu0 0.0
    %594 = vmatpush1.msra.mxu0 0.0
    %595 = vmatprep.subr.mxu0 0.0
    %596 = vmatpush1.msra.mxu0 0.0
    %597 = vmatprep.subr.mxu0 0.0
    %598 = vmatpush1.msra.mxu0 0.0
    %599 = vmatprep.subr.mxu0 0.0
    %600 = vmatpush1.msra.mxu0 0.0
    %601 = vmatprep.subr.mxu0 0.0
    %602 = vmatpush1.msra.mxu0 0.0
    %603 = vmatprep.subr.mxu0 0.0
    %604 = vmatpush1.msra.mxu0 0.0
    %605 = vmatprep.subr.mxu0 0.0
    %606 = vmatpush1.msra.mxu0 0.0
    %607 = vmatprep.subr.mxu0 0.0
    %608 = vmatpush1.msra.mxu0 0.0
    %609 = vmatprep.subr.mxu0 0.0
    %610 = vmatpush1.msra.mxu0 0.0
    %611 = vmatprep.subr.mxu0 0.0
    %612 = vmatpush1.msra.mxu0 0.0
    %613 = vmatprep.subr.mxu0 0.0
    %614 = vmatpush1.msra.mxu0 0.0
    %615 = vmatprep.subr.mxu0 0.0
    %616 = vmatpush1.msra.mxu0 0.0
    %617 = vmatprep.subr.mxu0 0.0
    %618 = vmatpush1.msra.mxu0 0.0
    %619 = vmatprep.subr.mxu0 0.0
    %620 = vmatpush1.msra.mxu0 0.0
    %621 = vmatprep.subr.mxu0 0.0
    %622 = vmatpush1.msra.mxu0 0.0
    %623 = vmatprep.subr.mxu0 0.0
    %624 = vmatpush1.msra.mxu0 0.0
    %625 = vmatprep.subr.mxu0 0.0
    %626 = vmatpush1.msra.mxu0 0.0
    %627 = vmatprep.subr.mxu0 0.0
    %628 = vmatpush1.msra.mxu0 0.0
    %629 = vmatprep.subr.mxu0 0.0
    %630 = vmatpush1.msra.mxu0 0.0
    %631 = vmatprep.mubr.f32.mxu0 0.0
    %632 = vmatmul.mubr.f32.gmra.mrb[0].mxu0 %v531
    %v633 = vpop.f32.mrb[0].mxu0
    %v634 = vadd.f32 0.0, %v633
    %v635 = vpop.f32.mrb[0].mxu0
    %636 = vmatprep.mubr.f32.mxu0 0.0
    %637 = vmatmul.mubr.f32.gmra.mrb[0].mxu0 %v533
    %v638 = vpop.f32.mrb[0].mxu0
    %v639 = vadd.f32 0.0, %v638
    %v640 = vpop.f32.mrb[0].mxu0
    %641 = vmatprep.mubr.f32.mxu0 0.0
    %642 = vmatmul.mubr.f32.gmra.mrb[0].mxu0 %v535
    %v643 = vpop.f32.mrb[0].mxu0
    %v644 = vadd.f32 0.0, %v643
    %v645 = vpop.f32.mrb[0].mxu0
    %646 = vmatprep.mubr.f32.mxu0 0.0
    %647 = vmatmul.mubr.f32.gmra.mrb[0].mxu0 %v537
    %v648 = vpop.f32.mrb[0].mxu0
    %v649 = vadd.f32 0.0, %v648
    %v650 = vpop.f32.mrb[0].mxu0
    %651 = vmatprep.mubr.f32.mxu0 0.0
    %652 = vmatmul.mubr.f32.gmra.mrb[0].mxu0 %v539
    %v653 = vpop.f32.mrb[0].mxu0
    %v654 = vadd.f32 0.0, %v653
    %v655 = vpop.f32.mrb[0].mxu0
    %656 = vmatprep.mubr.f32.mxu0 0.0
    %657 = vmatmul.mubr.f32.gmra.mrb[0].mxu0 %v541
    %v658 = vpop.f32.mrb[0].mxu0
    %v659 = vadd.f32 0.0, %v658
    %v660 = vpop.f32.mrb[0].mxu0
    %661 = vmatprep.mubr.f32.mxu0 0.0
    %662 = vmatmul.mubr.f32.gmra.mrb[0].mxu0 %v543
    %v663 = vpop.f32.mrb[0].mxu0
    %v664 = vadd.f32 0.0, %v663
    %v665 = vpop.f32.mrb[0].mxu0
    %666 = vmatprep.mubr.f32.mxu0 0.0
    %667 = vmatmul.mubr.f32.gmra.mrb[0].mxu0 %v545
    %v668 = vpop.f32.mrb[0].mxu0
    %v669 = vadd.f32 0.0, %v668
    %v670 = vpop.f32.mrb[0].mxu0
    %671 = vmatprep.mubr.f32.mxu0 0.0
    %672 = vmatmul.mubr.f32.gmra.mrb[0].mxu0 %v547
    %v673 = vpop.f32.mrb[0].mxu0
    %v674 = vadd.f32 0.0, %v673
    %v675 = vpop.f32.mrb[0].mxu0
    %676 = vmatprep.mubr.f32.mxu0 0.0
    %677 = vmatmul.mubr.f32.gmra.mrb[0].mxu0 %v549
    %v678 = vpop.f32.mrb[0].mxu0
    %v679 = vadd.f32 0.0, %v678
    %v680 = vpop.f32.mrb[0].mxu0
    %681 = vmatprep.mubr.f32.mxu0 0.0
    %682 = vmatmul.mubr.f32.gmra.mrb[0].mxu0 %v551
    %v683 = vpop.f32.mrb[0].mxu0
    %v684 = vadd.f32 0.0, %v683
    %v685 = vpop.f32.mrb[0].mxu0
    %686 = vmatprep.mubr.f32.mxu0 0.0
    %687 = vmatmul.mubr.f32.gmra.mrb[0].mxu0 %v553
    %v688 = vpop.f32.mrb[0].mxu0
    %v689 = vadd.f32 0.0, %v688
    %v690 = vpop.f32.mrb[0].mxu0
    %691 = vmatprep.mubr.f32.mxu0 0.0
    %692 = vmatmul.mubr.f32.gmra.mrb[0].mxu0 %v555
    %v693 = vpop.f32.mrb[0].mxu0
    %v694 = vadd.f32 0.0, %v693
    %v695 = vpop.f32.mrb[0].mxu0
    %696 = vmatprep.mubr.f32.mxu0 0.0
    %697 = vmatmul.mubr.f32.gmra.mrb[0].mxu0 %v557
    %v698 = vpop.f32.mrb[0].mxu0
    %v699 = vadd.f32 0.0, %v698
    %v700 = vpop.f32.mrb[0].mxu0
    %701 = vmatprep.mubr.f32.mxu0 0.0
    %702 = vmatmul.mubr.f32.gmra.mrb[0].mxu0 %v559
    %v703 = vpop.f32.mrb[0].mxu0
    %v704 = vadd.f32 0.0, %v703
    %v705 = vpop.f32.mrb[0].mxu0
    %706 = vmatprep.mubr.f32.mxu0 0.0
    %707 = vmatmul.mubr.f32.gmra.mrb[0].mxu0 %v561
    %v708 = vpop.f32.mrb[0].mxu0
    %v709 = vadd.f32 0.0, %v708
    %v710 = vpop.f32.mrb[0].mxu0
    %711 = vdwg.mxu0
    %v713 = vsel %vm530, %v445, 0
    %v716 = vsel %vm530, %v446, 0
    %v719 = vsel %vm530, %v447, 0
    %v722 = vsel %vm530, %v448, 0
    %v725 = vsel %vm530, %v449, 0
    %v728 = vsel %vm530, %v450, 0
    %v731 = vsel %vm530, %v451, 0
    %v734 = vsel %vm530, %v452, 0
    %v737 = vsel %vm530, %v453, 0
    %v740 = vsel %vm530, %v454, 0
    %v743 = vsel %vm530, %v455, 0
    %v746 = vsel %vm530, %v456, 0
    %v749 = vsel %vm530, %v457, 0
    %v752 = vsel %vm530, %v458, 0
    %v755 = vsel %vm530, %v459, 0
    %v758 = vsel %vm530, %v460, 0
    %v761 = vsel %vm563, %v527, 0
    %763 = vmatprep.subr.mxu0 0.0
    %764 = vmatpush1.msra.mxu0 %v761
    %765 = vmatprep.subr.mxu0 0.0
    %766 = vmatpush1.msra.mxu0 0.0
    %767 = vmatprep.subr.mxu0 0.0
    %768 = vmatpush1.msra.mxu0 0.0
    %769 = vmatprep.subr.mxu0 0.0
    %770 = vmatpush1.msra.mxu0 0.0
    %771 = vmatprep.subr.mxu0 0.0
    %772 = vmatpush1.msra.mxu0 0.0
    %773 = vmatprep.subr.mxu0 0.0
    %774 = vmatpush1.msra.mxu0 0.0
    %775 = vmatprep.subr.mxu0 0.0
    %776 = vmatpush1.msra.mxu0 0.0
    %777 = vmatprep.subr.mxu0 0.0
    %778 = vmatpush1.msra.mxu0 0.0
    %779 = vmatprep.subr.mxu0 0.0
    %780 = vmatpush1.msra.mxu0 0.0
    %781 = vmatprep.subr.mxu0 0.0
    %782 = vmatpush1.msra.mxu0 0.0
    %783 = vmatprep.subr.mxu0 0.0
    %784 = vmatpush1.msra.mxu0 0.0
    %785 = vmatprep.subr.mxu0 0.0
    %786 = vmatpush1.msra.mxu0 0.0
    %787 = vmatprep.subr.mxu0 0.0
    %788 = vmatpush1.msra.mxu0 0.0
    %789 = vmatprep.subr.mxu0 0.0
    %790 = vmatpush1.msra.mxu0 0.0
    %791 = vmatprep.subr.mxu0 0.0
    %792 = vmatpush1.msra.mxu0 0.0
    %793 = vmatprep.subr.mxu0 0.0
    %794 = vmatpush1.msra.mxu0 0.0
    %795 = vmatprep.subr.mxu0 0.0
    %796 = vmatpush1.msra.mxu0 0.0
    %797 = vmatprep.subr.mxu0 0.0
    %798 = vmatpush1.msra.mxu0 0.0
    %799 = vmatprep.subr.mxu0 0.0
    %800 = vmatpush1.msra.mxu0 0.0
    %801 = vmatprep.subr.mxu0 0.0
    %802 = vmatpush1.msra.mxu0 0.0
    %803 = vmatprep.subr.mxu0 0.0
    %804 = vmatpush1.msra.mxu0 0.0
    %805 = vmatprep.subr.mxu0 0.0
    %806 = vmatpush1.msra.mxu0 0.0
    %807 = vmatprep.subr.mxu0 0.0
    %808 = vmatpush1.msra.mxu0 0.0
    %809 = vmatprep.subr.mxu0 0.0
    %810 = vmatpush1.msra.mxu0 0.0
    %811 = vmatprep.subr.mxu0 0.0
    %812 = vmatpush1.msra.mxu0 0.0
    %813 = vmatprep.subr.mxu0 0.0
    %814 = vmatpush1.msra.mxu0 0.0
    %815 = vmatprep.subr.mxu0 0.0
    %816 = vmatpush1.msra.mxu0 0.0
    %817 = vmatprep.subr.mxu0 0.0
    %818 = vmatpush1.msra.mxu0 0.0
    %819 = vmatprep.subr.mxu0 0.0
    %820 = vmatpush1.msra.mxu0 0.0
    %821 = vmatprep.subr.mxu0 0.0
    %822 = vmatpush1.msra.mxu0 0.0
    %823 = vmatprep.subr.mxu0 0.0
    %824 = vmatpush1.msra.mxu0 0.0
    %825 = vmatprep.subr.mxu0 0.0
    %826 = vmatpush1.msra.mxu0 0.0
    %827 = vmatprep.mubr.f32.mxu0 0.0
    %828 = vmatmul.mubr.f32.gmra.mrb[0].mxu0 %v713
    %v829 = vpop.f32.mrb[0].mxu0
    %v830 = vadd.f32 %v634, %v829
    %v831 = vpop.f32.mrb[0].mxu0
    %832 = vmatprep.mubr.f32.mxu0 0.0
    %833 = vmatmul.mubr.f32.gmra.mrb[0].mxu0 %v716
    %v834 = vpop.f32.mrb[0].mxu0
    %v835 = vadd.f32 %v639, %v834
    %v836 = vpop.f32.mrb[0].mxu0
    %837 = vmatprep.mubr.f32.mxu0 0.0
    %838 = vmatmul.mubr.f32.gmra.mrb[0].mxu0 %v719
    %v839 = vpop.f32.mrb[0].mxu0
    %v840 = vadd.f32 %v644, %v839
    %v841 = vpop.f32.mrb[0].mxu0
    %842 = vmatprep.mubr.f32.mxu0 0.0
    %843 = vmatmul.mubr.f32.gmra.mrb[0].mxu0 %v722
    %v844 = vpop.f32.mrb[0].mxu0
    %v845 = vadd.f32 %v649, %v844
    %v846 = vpop.f32.mrb[0].mxu0
    %847 = vmatprep.mubr.f32.mxu0 0.0
    %848 = vmatmul.mubr.f32.gmra.mrb[0].mxu0 %v725
    %v849 = vpop.f32.mrb[0].mxu0
    %v850 = vadd.f32 %v654, %v849
    %v851 = vpop.f32.mrb[0].mxu0
    %852 = vmatprep.mubr.f32.mxu0 0.0
    %853 = vmatmul.mubr.f32.gmra.mrb[0].mxu0 %v728
    %v854 = vpop.f32.mrb[0].mxu0
    %v855 = vadd.f32 %v659, %v854
    %v856 = vpop.f32.mrb[0].mxu0
    %857 = vmatprep.mubr.f32.mxu0 0.0
    %858 = vmatmul.mubr.f32.gmra.mrb[0].mxu0 %v731
    %v859 = vpop.f32.mrb[0].mxu0
    %v860 = vadd.f32 %v664, %v859
    %v861 = vpop.f32.mrb[0].mxu0
    %862 = vmatprep.mubr.f32.mxu0 0.0
    %863 = vmatmul.mubr.f32.gmra.mrb[0].mxu0 %v734
    %v864 = vpop.f32.mrb[0].mxu0
    %v865 = vadd.f32 %v669, %v864
    %v866 = vpop.f32.mrb[0].mxu0
    %867 = vmatprep.mubr.f32.mxu0 0.0
    %868 = vmatmul.mubr.f32.gmra.mrb[0].mxu0 %v737
    %v869 = vpop.f32.mrb[0].mxu0
    %v870 = vadd.f32 %v674, %v869
    %v871 = vpop.f32.mrb[0].mxu0
    %872 = vmatprep.mubr.f32.mxu0 0.0
    %873 = vmatmul.mubr.f32.gmra.mrb[0].mxu0 %v740
    %v874 = vpop.f32.mrb[0].mxu0
    %v875 = vadd.f32 %v679, %v874
    %v876 = vpop.f32.mrb[0].mxu0
    %877 = vmatprep.mubr.f32.mxu0 0.0
    %878 = vmatmul.mubr.f32.gmra.mrb[0].mxu0 %v743
    %v879 = vpop.f32.mrb[0].mxu0
    %v880 = vadd.f32 %v684, %v879
    %v881 = vpop.f32.mrb[0].mxu0
    %882 = vmatprep.mubr.f32.mxu0 0.0
    %883 = vmatmul.mubr.f32.gmra.mrb[0].mxu0 %v746
    %v884 = vpop.f32.mrb[0].mxu0
    %v885 = vadd.f32 %v689, %v884
    %v886 = vpop.f32.mrb[0].mxu0
    %887 = vmatprep.mubr.f32.mxu0 0.0
    %888 = vmatmul.mubr.f32.gmra.mrb[0].mxu0 %v749
    %v889 = vpop.f32.mrb[0].mxu0
    %v890 = vadd.f32 %v694, %v889
    %v891 = vpop.f32.mrb[0].mxu0
    %892 = vmatprep.mubr.f32.mxu0 0.0
    %893 = vmatmul.mubr.f32.gmra.mrb[0].mxu0 %v752
    %v894 = vpop.f32.mrb[0].mxu0
    %v895 = vadd.f32 %v699, %v894
    %v896 = vpop.f32.mrb[0].mxu0
    %897 = vmatprep.mubr.f32.mxu0 0.0
    %898 = vmatmul.mubr.f32.gmra.mrb[0].mxu0 %v755
    %v899 = vpop.f32.mrb[0].mxu0
    %v900 = vadd.f32 %v704, %v899
    %v901 = vpop.f32.mrb[0].mxu0
    %902 = vmatprep.mubr.f32.mxu0 0.0
    %903 = vmatmul.mubr.f32.gmra.mrb[0].mxu0 %v758
    %v904 = vpop.f32.mrb[0].mxu0
    %v905 = vadd.f32 %v709, %v904
    %v906 = vpop.f32.mrb[0].mxu0
    %907 = vdwg.mxu0
    %s908 = scalar_lea.vmem %s2, 8
    %v909 = vld [vmem:[%s908] sm:$0xf]
    %v911 = vsel %vm530, %v511, 0
    %v914 = vsel %vm530, %v512, 0
    %v917 = vsel %vm530, %v513, 0
    %v920 = vsel %vm530, %v514, 0
    %v923 = vsel %vm530, %v515, 0
    %v926 = vsel %vm530, %v516, 0
    %v929 = vsel %vm530, %v517, 0
    %v932 = vsel %vm530, %v518, 0
    %v935 = vsel %vm530, %v519, 0
    %v938 = vsel %vm530, %v520, 0
    %v941 = vsel %vm530, %v521, 0
    %v944 = vsel %vm530, %v522, 0
    %v947 = vsel %vm530, %v523, 0
    %v950 = vsel %vm530, %v524, 0
    %v953 = vsel %vm530, %v525, 0
    %v956 = vsel %vm530, %v526, 0
    %v959 = vsel %vm563, %v909, 0
    %961 = vmatprep.subr.mxu0 0.0
    %962 = vmatpush1.msra.mxu0 %v959
    %963 = vmatprep.subr.mxu0 0.0
    %964 = vmatpush1.msra.mxu0 0.0
    %965 = vmatprep.subr.mxu0 0.0
    %966 = vmatpush1.msra.mxu0 0.0
    %967 = vmatprep.subr.mxu0 0.0
    %968 = vmatpush1.msra.mxu0 0.0
    %969 = vmatprep.subr.mxu0 0.0
    %970 = vmatpush1.msra.mxu0 0.0
    %971 = vmatprep.subr.mxu0 0.0
    %972 = vmatpush1.msra.mxu0 0.0
    %973 = vmatprep.subr.mxu0 0.0
    %974 = vmatpush1.msra.mxu0 0.0
    %975 = vmatprep.subr.mxu0 0.0
    %976 = vmatpush1.msra.mxu0 0.0
    %977 = vmatprep.subr.mxu0 0.0
    %978 = vmatpush1.msra.mxu0 0.0
    %979 = vmatprep.subr.mxu0 0.0
    %980 = vmatpush1.msra.mxu0 0.0
    %981 = vmatprep.subr.mxu0 0.0
    %982 = vmatpush1.msra.mxu0 0.0
    %983 = vmatprep.subr.mxu0 0.0
    %984 = vmatpush1.msra.mxu0 0.0
    %985 = vmatprep.subr.mxu0 0.0
    %986 = vmatpush1.msra.mxu0 0.0
    %987 = vmatprep.subr.mxu0 0.0
    %988 = vmatpush1.msra.mxu0 0.0
    %989 = vmatprep.subr.mxu0 0.0
    %990 = vmatpush1.msra.mxu0 0.0
    %991 = vmatprep.subr.mxu0 0.0
    %992 = vmatpush1.msra.mxu0 0.0
    %993 = vmatprep.subr.mxu0 0.0
    %994 = vmatpush1.msra.mxu0 0.0
    %995 = vmatprep.subr.mxu0 0.0
    %996 = vmatpush1.msra.mxu0 0.0
    %997 = vmatprep.subr.mxu0 0.0
    %998 = vmatpush1.msra.mxu0 0.0
    %999 = vmatprep.subr.mxu0 0.0
    %1000 = vmatpush1.msra.mxu0 0.0
    %1001 = vmatprep.subr.mxu0 0.0
    %1002 = vmatpush1.msra.mxu0 0.0
    %1003 = vmatprep.subr.mxu0 0.0
    %1004 = vmatpush1.msra.mxu0 0.0
    %1005 = vmatprep.subr.mxu0 0.0
    %1006 = vmatpush1.msra.mxu0 0.0
    %1007 = vmatprep.subr.mxu0 0.0
    %1008 = vmatpush1.msra.mxu0 0.0
    %1009 = vmatprep.subr.mxu0 0.0
    %1010 = vmatpush1.msra.mxu0 0.0
    %1011 = vmatprep.subr.mxu0 0.0
    %1012 = vmatpush1.msra.mxu0 0.0
    %1013 = vmatprep.subr.mxu0 0.0
    %1014 = vmatpush1.msra.mxu0 0.0
    %1015 = vmatprep.subr.mxu0 0.0
    %1016 = vmatpush1.msra.mxu0 0.0
    %1017 = vmatprep.subr.mxu0 0.0
    %1018 = vmatpush1.msra.mxu0 0.0
    %1019 = vmatprep.subr.mxu0 0.0
    %1020 = vmatpush1.msra.mxu0 0.0
    %1021 = vmatprep.subr.mxu0 0.0
    %1022 = vmatpush1.msra.mxu0 0.0
    %1023 = vmatprep.subr.mxu0 0.0
    %1024 = vmatpush1.msra.mxu0 0.0
    %1025 = vmatprep.mubr.f32.mxu0 0.0
    %1026 = vmatmul.mubr.f32.gmra.mrb[0].mxu0 %v911
    %v1027 = vpop.f32.mrb[0].mxu0
    %v1028 = vadd.f32 0.0, %v1027
    %v1029 = vpop.f32.mrb[0].mxu0
    %1030 = vmatprep.mubr.f32.mxu0 0.0
    %1031 = vmatmul.mubr.f32.gmra.mrb[0].mxu0 %v914
    %v1032 = vpop.f32.mrb[0].mxu0
    %v1033 = vadd.f32 0.0, %v1032
    %v1034 = vpop.f32.mrb[0].mxu0
    %1035 = vmatprep.mubr.f32.mxu0 0.0
    %1036 = vmatmul.mubr.f32.gmra.mrb[0].mxu0 %v917
    %v1037 = vpop.f32.mrb[0].mxu0
    %v1038 = vadd.f32 0.0, %v1037
    %v1039 = vpop.f32.mrb[0].mxu0
    %1040 = vmatprep.mubr.f32.mxu0 0.0
    %1041 = vmatmul.mubr.f32.gmra.mrb[0].mxu0 %v920
    %v1042 = vpop.f32.mrb[0].mxu0
    %v1043 = vadd.f32 0.0, %v1042
    %v1044 = vpop.f32.mrb[0].mxu0
    %1045 = vmatprep.mubr.f32.mxu0 0.0
    %1046 = vmatmul.mubr.f32.gmra.mrb[0].mxu0 %v923
    %v1047 = vpop.f32.mrb[0].mxu0
    %v1048 = vadd.f32 0.0, %v1047
    %v1049 = vpop.f32.mrb[0].mxu0
    %1050 = vmatprep.mubr.f32.mxu0 0.0
    %1051 = vmatmul.mubr.f32.gmra.mrb[0].mxu0 %v926
    %v1052 = vpop.f32.mrb[0].mxu0
    %v1053 = vadd.f32 0.0, %v1052
    %v1054 = vpop.f32.mrb[0].mxu0
    %1055 = vmatprep.mubr.f32.mxu0 0.0
    %1056 = vmatmul.mubr.f32.gmra.mrb[0].mxu0 %v929
    %v1057 = vpop.f32.mrb[0].mxu0
    %v1058 = vadd.f32 0.0, %v1057
    %v1059 = vpop.f32.mrb[0].mxu0
    %1060 = vmatprep.mubr.f32.mxu0 0.0
    %1061 = vmatmul.mubr.f32.gmra.mrb[0].mxu0 %v932
    %v1062 = vpop.f32.mrb[0].mxu0
    %v1063 = vadd.f32 0.0, %v1062
    %v1064 = vpop.f32.mrb[0].mxu0
    %1065 = vmatprep.mubr.f32.mxu0 0.0
    %1066 = vmatmul.mubr.f32.gmra.mrb[0].mxu0 %v935
    %v1067 = vpop.f32.mrb[0].mxu0
    %v1068 = vadd.f32 0.0, %v1067
    %v1069 = vpop.f32.mrb[0].mxu0
    %1070 = vmatprep.mubr.f32.mxu0 0.0
    %1071 = vmatmul.mubr.f32.gmra.mrb[0].mxu0 %v938
    %v1072 = vpop.f32.mrb[0].mxu0
    %v1073 = vadd.f32 0.0, %v1072
    %v1074 = vpop.f32.mrb[0].mxu0
    %1075 = vmatprep.mubr.f32.mxu0 0.0
    %1076 = vmatmul.mubr.f32.gmra.mrb[0].mxu0 %v941
    %v1077 = vpop.f32.mrb[0].mxu0
    %v1078 = vadd.f32 0.0, %v1077
    %v1079 = vpop.f32.mrb[0].mxu0
    %1080 = vmatprep.mubr.f32.mxu0 0.0
    %1081 = vmatmul.mubr.f32.gmra.mrb[0].mxu0 %v944
    %v1082 = vpop.f32.mrb[0].mxu0
    %v1083 = vadd.f32 0.0, %v1082
    %v1084 = vpop.f32.mrb[0].mxu0
    %1085 = vmatprep.mubr.f32.mxu0 0.0
    %1086 = vmatmul.mubr.f32.gmra.mrb[0].mxu0 %v947
    %v1087 = vpop.f32.mrb[0].mxu0
    %v1088 = vadd.f32 0.0, %v1087
    %v1089 = vpop.f32.mrb[0].mxu0
    %1090 = vmatprep.mubr.f32.mxu0 0.0
    %1091 = vmatmul.mubr.f32.gmra.mrb[0].mxu0 %v950
    %v1092 = vpop.f32.mrb[0].mxu0
    %v1093 = vadd.f32 0.0, %v1092
    %v1094 = vpop.f32.mrb[0].mxu0
    %1095 = vmatprep.mubr.f32.mxu0 0.0
    %1096 = vmatmul.mubr.f32.gmra.mrb[0].mxu0 %v953
    %v1097 = vpop.f32.mrb[0].mxu0
    %v1098 = vadd.f32 0.0, %v1097
    %v1099 = vpop.f32.mrb[0].mxu0
    %1100 = vmatprep.mubr.f32.mxu0 0.0
    %1101 = vmatmul.mubr.f32.gmra.mrb[0].mxu0 %v956
    %v1102 = vpop.f32.mrb[0].mxu0
    %v1103 = vadd.f32 0.0, %v1102
    %v1104 = vpop.f32.mrb[0].mxu0
    %1105 = vdwg.mxu0
    %v1106 = vadd.f32 %v830, %v1028
    %v1107 = vadd.f32 %v835, %v1033
    %v1108 = vadd.f32 %v840, %v1038
    %v1109 = vadd.f32 %v845, %v1043
    %v1110 = vadd.f32 %v850, %v1048
    %v1111 = vadd.f32 %v855, %v1053
    %v1112 = vadd.f32 %v860, %v1058
    %v1113 = vadd.f32 %v865, %v1063
    %v1114 = vadd.f32 %v870, %v1068
    %v1115 = vadd.f32 %v875, %v1073
    %v1116 = vadd.f32 %v880, %v1078
    %v1117 = vadd.f32 %v885, %v1083
    %v1118 = vadd.f32 %v890, %v1088
    %v1119 = vadd.f32 %v895, %v1093
    %v1120 = vadd.f32 %v900, %v1098
    %v1121 = vadd.f32 %v905, %v1103
    %v1122 = vld [vmem:[%s3] sm:$0x1]
    %v1124 = vlaneseq
    %v1125 = vshrl.u32 %v1124, 7
    %v1126 = vsub.s32 0, %v1125
    %v1127 = vrot.slane %v1122, %v1126
    %v1129 = vadd.f32 %v1106, %v1127
    %v1130 = vadd.f32 %v1107, %v1127
    %v1131 = vadd.f32 %v1108, %v1127
    %v1132 = vadd.f32 %v1109, %v1127
    %v1133 = vadd.f32 %v1110, %v1127
    %v1134 = vadd.f32 %v1111, %v1127
    %v1135 = vadd.f32 %v1112, %v1127
    %v1136 = vadd.f32 %v1113, %v1127
    %v1137 = vadd.f32 %v1114, %v1127
    %v1138 = vadd.f32 %v1115, %v1127
    %v1139 = vadd.f32 %v1116, %v1127
    %v1140 = vadd.f32 %v1117, %v1127
    %v1141 = vadd.f32 %v1118, %v1127
    %v1142 = vadd.f32 %v1119, %v1127
    %v1143 = vadd.f32 %v1120, %v1127
    %v1144 = vadd.f32 %v1121, %v1127
    %v1145 = vmul.f32 %v1129, 0.5
    %v1146 = vmul.f32 %v1130, 0.5
    %v1147 = vmul.f32 %v1131, 0.5
    %v1148 = vmul.f32 %v1132, 0.5
    %v1149 = vmul.f32 %v1133, 0.5
    %v1150 = vmul.f32 %v1134, 0.5
    %v1151 = vmul.f32 %v1135, 0.5
    %v1152 = vmul.f32 %v1136, 0.5
    %v1153 = vmul.f32 %v1137, 0.5
    %v1154 = vmul.f32 %v1138, 0.5
    %v1155 = vmul.f32 %v1139, 0.5
    %v1156 = vmul.f32 %v1140, 0.5
    %v1157 = vmul.f32 %v1141, 0.5
    %v1158 = vmul.f32 %v1142, 0.5
    %v1159 = vmul.f32 %v1143, 0.5
    %v1160 = vmul.f32 %v1144, 0.5
    %v1161 = vmul.f32 %v1129, 0.70710677
    %v1162 = vmul.f32 %v1130, 0.70710677
    %v1163 = vmul.f32 %v1131, 0.70710677
    %v1164 = vmul.f32 %v1132, 0.70710677
    %v1165 = vmul.f32 %v1133, 0.70710677
    %v1166 = vmul.f32 %v1134, 0.70710677
    %v1167 = vmul.f32 %v1135, 0.70710677
    %v1168 = vmul.f32 %v1136, 0.70710677
    %v1169 = vmul.f32 %v1137, 0.70710677
    %v1170 = vmul.f32 %v1138, 0.70710677
    %v1171 = vmul.f32 %v1139, 0.70710677
    %v1172 = vmul.f32 %v1140, 0.70710677
    %v1173 = vmul.f32 %v1141, 0.70710677
    %v1174 = vmul.f32 %v1142, 0.70710677
    %v1175 = vmul.f32 %v1143, 0.70710677
    %v1176 = vmul.f32 %v1144, 0.70710677
    %v1177 = verf.f32.pop %v1161
    %v1178 = verf.f32.pop %v1162
    %v1179 = verf.f32.pop %v1163
    %v1180 = verf.f32.pop %v1164
    %v1181 = verf.f32.pop %v1165
    %v1182 = verf.f32.pop %v1166
    %v1183 = verf.f32.pop %v1167
    %v1184 = verf.f32.pop %v1168
    %v1185 = verf.f32.pop %v1169
    %v1186 = verf.f32.pop %v1170
    %v1187 = verf.f32.pop %v1171
    %v1188 = verf.f32.pop %v1172
    %v1189 = verf.f32.pop %v1173
    %v1190 = verf.f32.pop %v1174
    %v1191 = verf.f32.pop %v1175
    %v1192 = verf.f32.pop %v1176
    %v1193 = vadd.f32 %v1177, 1.0
    %v1194 = vadd.f32 %v1178, 1.0
    %v1195 = vadd.f32 %v1179, 1.0
    %v1196 = vadd.f32 %v1180, 1.0
    %v1197 = vadd.f32 %v1181, 1.0
    %v1198 = vadd.f32 %v1182, 1.0
    %v1199 = vadd.f32 %v1183, 1.0
    %v1200 = vadd.f32 %v1184, 1.0
    %v1201 = vadd.f32 %v1185, 1.0
    %v1202 = vadd.f32 %v1186, 1.0
    %v1203 = vadd.f32 %v1187, 1.0
    %v1204 = vadd.f32 %v1188, 1.0
    %v1205 = vadd.f32 %v1189, 1.0
    %v1206 = vadd.f32 %v1190, 1.0
    %v1207 = vadd.f32 %v1191, 1.0
    %v1208 = vadd.f32 %v1192, 1.0
    %v1209 = vmul.f32 %v1145, %v1193
    %v1210 = vmul.f32 %v1146, %v1194
    %v1211 = vmul.f32 %v1147, %v1195
    %v1212 = vmul.f32 %v1148, %v1196
    %v1213 = vmul.f32 %v1149, %v1197
    %v1214 = vmul.f32 %v1150, %v1198
    %v1215 = vmul.f32 %v1151, %v1199
    %v1216 = vmul.f32 %v1152, %v1200
    %v1217 = vmul.f32 %v1153, %v1201
    %v1218 = vmul.f32 %v1154, %v1202
    %v1219 = vmul.f32 %v1155, %v1203
    %v1220 = vmul.f32 %v1156, %v1204
    %v1221 = vmul.f32 %v1157, %v1205
    %v1222 = vmul.f32 %v1158, %v1206
    %v1223 = vmul.f32 %v1159, %v1207
    %v1224 = vmul.f32 %v1160, %v1208
    %v1226 = vrot.slane %v1224, 7
    %v1243 = vrot.slane %v1209, 7
    %v1244 = vrot.slane %v1210, 7
    %v1245 = vsel %vm397, %v1243, %v1244
    %v1246 = vrot.slane %v1211, 7
    %v1247 = vsel %vm397, %v1244, %v1246
    %v1248 = vrot.slane %v1212, 7
    %v1249 = vsel %vm397, %v1246, %v1248
    %v1250 = vrot.slane %v1213, 7
    %v1251 = vsel %vm397, %v1248, %v1250
    %v1252 = vrot.slane %v1214, 7
    %v1253 = vsel %vm397, %v1250, %v1252
    %v1254 = vrot.slane %v1215, 7
    %v1255 = vsel %vm397, %v1252, %v1254
    %v1256 = vrot.slane %v1216, 7
    %v1257 = vsel %vm397, %v1254, %v1256
    %v1258 = vrot.slane %v1217, 7
    %v1259 = vsel %vm397, %v1256, %v1258
    %v1260 = vrot.slane %v1218, 7
    %v1261 = vsel %vm397, %v1258, %v1260
    %v1262 = vrot.slane %v1219, 7
    %v1263 = vsel %vm397, %v1260, %v1262
    %v1264 = vrot.slane %v1220, 7
    %v1265 = vsel %vm397, %v1262, %v1264
    %v1266 = vrot.slane %v1221, 7
    %v1267 = vsel %vm397, %v1264, %v1266
    %v1268 = vrot.slane %v1222, 7
    %v1269 = vsel %vm397, %v1266, %v1268
    %v1270 = vrot.slane %v1223, 7
    %v1271 = vsel %vm397, %v1268, %v1270
    %v1272 = vsel %vm397, %v1270, %v1226
    %v1289 = vsel %vm397, %v1226, %v1243
    %v1290 = vmul.f32 %v299, %v1289
    %v1291 = vmul.f32 %v300, %v1245
    %v1292 = vmul.f32 %v301, %v1247
    %v1293 = vmul.f32 %v302, %v1249
    %v1294 = vmul.f32 %v303, %v1251
    %v1295 = vmul.f32 %v304, %v1253
    %v1296 = vmul.f32 %v305, %v1255
    %v1297 = vmul.f32 %v306, %v1257
    %v1298 = vmul.f32 %v307, %v1259
    %v1299 = vmul.f32 %v308, %v1261
    %v1300 = vmul.f32 %v309, %v1263
    %v1301 = vmul.f32 %v310, %v1265
    %v1302 = vmul.f32 %v311, %v1267
    %v1303 = vmul.f32 %v312, %v1269
    %v1304 = vmul.f32 %v313, %v1271
    %v1305 = vmul.f32 %v314, %v1272
    %v1306 = vrot.slane %v1209, 1
    %v1307 = vrot.slane %v1210, 1
    %v1308 = vsel %vm461, %v1306, %v1307
    %v1309 = vrot.slane %v1211, 1
    %v1310 = vsel %vm461, %v1307, %v1309
    %v1311 = vrot.slane %v1212, 1
    %v1312 = vsel %vm461, %v1309, %v1311
    %v1313 = vrot.slane %v1213, 1
    %v1314 = vsel %vm461, %v1311, %v1313
    %v1315 = vrot.slane %v1214, 1
    %v1316 = vsel %vm461, %v1313, %v1315
    %v1317 = vrot.slane %v1215, 1
    %v1318 = vsel %vm461, %v1315, %v1317
    %v1319 = vrot.slane %v1216, 1
    %v1320 = vsel %vm461, %v1317, %v1319
    %v1321 = vrot.slane %v1217, 1
    %v1322 = vsel %vm461, %v1319, %v1321
    %v1323 = vrot.slane %v1218, 1
    %v1324 = vsel %vm461, %v1321, %v1323
    %v1325 = vrot.slane %v1219, 1
    %v1326 = vsel %vm461, %v1323, %v1325
    %v1327 = vrot.slane %v1220, 1
    %v1328 = vsel %vm461, %v1325, %v1327
    %v1329 = vrot.slane %v1221, 1
    %v1330 = vsel %vm461, %v1327, %v1329
    %v1331 = vrot.slane %v1222, 1
    %v1332 = vsel %vm461, %v1329, %v1331
    %v1333 = vrot.slane %v1223, 1
    %v1334 = vsel %vm461, %v1331, %v1333
    %v1335 = vrot.slane %v1224, 1
    %v1336 = vsel %vm461, %v1333, %v1335
    %v1354 = vsel %vm461, %v1335, %v1306
    %v1355 = vmul.f32 %v347, %v1308
    %v1356 = vmul.f32 %v348, %v1310
    %v1357 = vmul.f32 %v349, %v1312
    %v1358 = vmul.f32 %v350, %v1314
    %v1359 = vmul.f32 %v351, %v1316
    %v1360 = vmul.f32 %v352, %v1318
    %v1361 = vmul.f32 %v353, %v1320
    %v1362 = vmul.f32 %v354, %v1322
    %v1363 = vmul.f32 %v355, %v1324
    %v1364 = vmul.f32 %v356, %v1326
    %v1365 = vmul.f32 %v357, %v1328
    %v1366 = vmul.f32 %v358, %v1330
    %v1367 = vmul.f32 %v359, %v1332
    %v1368 = vmul.f32 %v360, %v1334
    %v1369 = vmul.f32 %v361, %v1336
    %v1370 = vmul.f32 %v362, %v1354
    %v1371 = vld [vmem:[#allocation2] sm:$0xff]
    %v1372 = vld [vmem:[#allocation2 + $0x8] sm:$0xff]
    %v1373 = vld [vmem:[#allocation2 + $0x10] sm:$0xff]
    %v1374 = vld [vmem:[#allocation2 + $0x18] sm:$0xff]
    %v1375 = vld [vmem:[#allocation2 + $0x20] sm:$0xff]
    %v1376 = vld [vmem:[#allocation2 + $0x28] sm:$0xff]
    %v1377 = vld [vmem:[#allocation2 + $0x30] sm:$0xff]
    %v1378 = vld [vmem:[#allocation2 + $0x38] sm:$0xff]
    %v1379 = vld [vmem:[#allocation2 + $0x40] sm:$0xff]
    %v1380 = vld [vmem:[#allocation2 + $0x48] sm:$0xff]
    %v1381 = vld [vmem:[#allocation2 + $0x50] sm:$0xff]
    %v1382 = vld [vmem:[#allocation2 + $0x58] sm:$0xff]
    %v1383 = vld [vmem:[#allocation2 + $0x60] sm:$0xff]
    %v1384 = vld [vmem:[#allocation2 + $0x68] sm:$0xff]
    %v1385 = vld [vmem:[#allocation2 + $0x70] sm:$0xff]
    %v1386 = vld [vmem:[#allocation2 + $0x78] sm:$0xff]
    %s1387 = scalar_lea.vmem [#allocation2], 128
    %v1388 = vld [vmem:[%s1387] sm:$0xff]
    %v1389 = vld [vmem:[%s1387 + $0x8] sm:$0xff]
    %v1390 = vld [vmem:[%s1387 + $0x10] sm:$0xff]
    %v1391 = vld [vmem:[%s1387 + $0x18] sm:$0xff]
    %v1392 = vld [vmem:[%s1387 + $0x20] sm:$0xff]
    %v1393 = vld [vmem:[%s1387 + $0x28] sm:$0xff]
    %v1394 = vld [vmem:[%s1387 + $0x30] sm:$0xff]
    %v1395 = vld [vmem:[%s1387 + $0x38] sm:$0xff]
    %v1396 = vld [vmem:[%s1387 + $0x40] sm:$0xff]
    %v1397 = vld [vmem:[%s1387 + $0x48] sm:$0xff]
    %v1398 = vld [vmem:[%s1387 + $0x50] sm:$0xff]
    %v1399 = vld [vmem:[%s1387 + $0x58] sm:$0xff]
    %v1400 = vld [vmem:[%s1387 + $0x60] sm:$0xff]
    %v1401 = vld [vmem:[%s1387 + $0x68] sm:$0xff]
    %v1402 = vld [vmem:[%s1387 + $0x70] sm:$0xff]
    %v1403 = vld [vmem:[%s1387 + $0x78] sm:$0xff]
    %1404 = vmatprep.subr.mxu0 0.0
    %1405 = vmatpush1.msra.mxu0 %v1388
    %1406 = vmatprep.subr.mxu0 0.0
    %1407 = vmatpush1.msra.mxu0 %v1389
    %1408 = vmatprep.subr.mxu0 0.0
    %1409 = vmatpush1.msra.mxu0 %v1390
    %1410 = vmatprep.subr.mxu0 0.0
    %1411 = vmatpush1.msra.mxu0 %v1391
    %1412 = vmatprep.subr.mxu0 0.0
    %1413 = vmatpush1.msra.mxu0 %v1392
    %1414 = vmatprep.subr.mxu0 0.0
    %1415 = vmatpush1.msra.mxu0 %v1393
    %1416 = vmatprep.subr.mxu0 0.0
    %1417 = vmatpush1.msra.mxu0 %v1394
    %1418 = vmatprep.subr.mxu0 0.0
    %1419 = vmatpush1.msra.mxu0 %v1395
    %1420 = vmatprep.subr.mxu0 0.0
    %1421 = vmatpush1.msra.mxu0 %v1396
    %1422 = vmatprep.subr.mxu0 0.0
    %1423 = vmatpush1.msra.mxu0 %v1397
    %1424 = vmatprep.subr.mxu0 0.0
    %1425 = vmatpush1.msra.mxu0 %v1398
    %1426 = vmatprep.subr.mxu0 0.0
    %1427 = vmatpush1.msra.mxu0 %v1399
    %1428 = vmatprep.subr.mxu0 0.0
    %1429 = vmatpush1.msra.mxu0 %v1400
    %1430 = vmatprep.subr.mxu0 0.0
    %1431 = vmatpush1.msra.mxu0 %v1401
    %1432 = vmatprep.subr.mxu0 0.0
    %1433 = vmatpush1.msra.mxu0 %v1402
    %1434 = vmatprep.subr.mxu0 0.0
    %1435 = vmatpush1.msra.mxu0 %v1403
    %1436 = vmatprep.subr.mxu0 0.0
    %1437 = vmatpush1.msra.mxu0 0.0
    %1438 = vmatprep.subr.mxu0 0.0
    %1439 = vmatpush1.msra.mxu0 0.0
    %1440 = vmatprep.subr.mxu0 0.0
    %1441 = vmatpush1.msra.mxu0 0.0
    %1442 = vmatprep.subr.mxu0 0.0
    %1443 = vmatpush1.msra.mxu0 0.0
    %1444 = vmatprep.subr.mxu0 0.0
    %1445 = vmatpush1.msra.mxu0 0.0
    %1446 = vmatprep.subr.mxu0 0.0
    %1447 = vmatpush1.msra.mxu0 0.0
    %1448 = vmatprep.subr.mxu0 0.0
    %1449 = vmatpush1.msra.mxu0 0.0
    %1450 = vmatprep.subr.mxu0 0.0
    %1451 = vmatpush1.msra.mxu0 0.0
    %1452 = vmatprep.subr.mxu0 0.0
    %1453 = vmatpush1.msra.mxu0 0.0
    %1454 = vmatprep.subr.mxu0 0.0
    %1455 = vmatpush1.msra.mxu0 0.0
    %1456 = vmatprep.subr.mxu0 0.0
    %1457 = vmatpush1.msra.mxu0 0.0
    %1458 = vmatprep.subr.mxu0 0.0
    %1459 = vmatpush1.msra.mxu0 0.0
    %1460 = vmatprep.subr.mxu0 0.0
    %1461 = vmatpush1.msra.mxu0 0.0
    %1462 = vmatprep.subr.mxu0 0.0
    %1463 = vmatpush1.msra.mxu0 0.0
    %1464 = vmatprep.subr.mxu0 0.0
    %1465 = vmatpush1.msra.mxu0 0.0
    %1466 = vmatprep.subr.mxu0 0.0
    %1467 = vmatpush1.msra.mxu0 0.0
    %1468 = vmatprep.mubr.f32.mxu0 0.0
    %1469 = vmatmul.mubr.f32.gmra.mrb[0].mxu0 %v1209
    %v1470 = vpop.f32.mrb[0].mxu0
    %v1471 = vadd.f32 0.0, %v1470
    %v1472 = vpop.f32.mrb[0].mxu0
    %1473 = vmatprep.mubr.f32.mxu0 0.0
    %1474 = vmatmul.mubr.f32.gmra.mrb[0].mxu0 %v1210
    %v1475 = vpop.f32.mrb[0].mxu0
    %v1476 = vadd.f32 0.0, %v1475
    %v1477 = vpop.f32.mrb[0].mxu0
    %1478 = vmatprep.mubr.f32.mxu0 0.0
    %1479 = vmatmul.mubr.f32.gmra.mrb[0].mxu0 %v1211
    %v1480 = vpop.f32.mrb[0].mxu0
    %v1481 = vadd.f32 0.0, %v1480
    %v1482 = vpop.f32.mrb[0].mxu0
    %1483 = vmatprep.mubr.f32.mxu0 0.0
    %1484 = vmatmul.mubr.f32.gmra.mrb[0].mxu0 %v1212
    %v1485 = vpop.f32.mrb[0].mxu0
    %v1486 = vadd.f32 0.0, %v1485
    %v1487 = vpop.f32.mrb[0].mxu0
    %1488 = vmatprep.mubr.f32.mxu0 0.0
    %1489 = vmatmul.mubr.f32.gmra.mrb[0].mxu0 %v1213
    %v1490 = vpop.f32.mrb[0].mxu0
    %v1491 = vadd.f32 0.0, %v1490
    %v1492 = vpop.f32.mrb[0].mxu0
    %1493 = vmatprep.mubr.f32.mxu0 0.0
    %1494 = vmatmul.mubr.f32.gmra.mrb[0].mxu0 %v1214
    %v1495 = vpop.f32.mrb[0].mxu0
    %v1496 = vadd.f32 0.0, %v1495
    %v1497 = vpop.f32.mrb[0].mxu0
    %1498 = vmatprep.mubr.f32.mxu0 0.0
    %1499 = vmatmul.mubr.f32.gmra.mrb[0].mxu0 %v1215
    %v1500 = vpop.f32.mrb[0].mxu0
    %v1501 = vadd.f32 0.0, %v1500
    %v1502 = vpop.f32.mrb[0].mxu0
    %1503 = vmatprep.mubr.f32.mxu0 0.0
    %1504 = vmatmul.mubr.f32.gmra.mrb[0].mxu0 %v1216
    %v1505 = vpop.f32.mrb[0].mxu0
    %v1506 = vadd.f32 0.0, %v1505
    %v1507 = vpop.f32.mrb[0].mxu0
    %1508 = vmatprep.mubr.f32.mxu0 0.0
    %1509 = vmatmul.mubr.f32.gmra.mrb[0].mxu0 %v1217
    %v1510 = vpop.f32.mrb[0].mxu0
    %v1511 = vadd.f32 0.0, %v1510
    %v1512 = vpop.f32.mrb[0].mxu0
    %1513 = vmatprep.mubr.f32.mxu0 0.0
    %1514 = vmatmul.mubr.f32.gmra.mrb[0].mxu0 %v1218
    %v1515 = vpop.f32.mrb[0].mxu0
    %v1516 = vadd.f32 0.0, %v1515
    %v1517 = vpop.f32.mrb[0].mxu0
    %1518 = vmatprep.mubr.f32.mxu0 0.0
    %1519 = vmatmul.mubr.f32.gmra.mrb[0].mxu0 %v1219
    %v1520 = vpop.f32.mrb[0].mxu0
    %v1521 = vadd.f32 0.0, %v1520
    %v1522 = vpop.f32.mrb[0].mxu0
    %1523 = vmatprep.mubr.f32.mxu0 0.0
    %1524 = vmatmul.mubr.f32.gmra.mrb[0].mxu0 %v1220
    %v1525 = vpop.f32.mrb[0].mxu0
    %v1526 = vadd.f32 0.0, %v1525
    %v1527 = vpop.f32.mrb[0].mxu0
    %1528 = vmatprep.mubr.f32.mxu0 0.0
    %1529 = vmatmul.mubr.f32.gmra.mrb[0].mxu0 %v1221
    %v1530 = vpop.f32.mrb[0].mxu0
    %v1531 = vadd.f32 0.0, %v1530
    %v1532 = vpop.f32.mrb[0].mxu0
    %1533 = vmatprep.mubr.f32.mxu0 0.0
    %1534 = vmatmul.mubr.f32.gmra.mrb[0].mxu0 %v1222
    %v1535 = vpop.f32.mrb[0].mxu0
    %v1536 = vadd.f32 0.0, %v1535
    %v1537 = vpop.f32.mrb[0].mxu0
    %1538 = vmatprep.mubr.f32.mxu0 0.0
    %1539 = vmatmul.mubr.f32.gmra.mrb[0].mxu0 %v1223
    %v1540 = vpop.f32.mrb[0].mxu0
    %v1541 = vadd.f32 0.0, %v1540
    %v1542 = vpop.f32.mrb[0].mxu0
    %1543 = vmatprep.mubr.f32.mxu0 0.0
    %1544 = vmatmul.mubr.f32.gmra.mrb[0].mxu0 %v1224
    %v1545 = vpop.f32.mrb[0].mxu0
    %v1546 = vadd.f32 0.0, %v1545
    %v1547 = vpop.f32.mrb[0].mxu0
    %1548 = vdwg.mxu0
    %1549 = vmatprep.subr.mxu0 0.0
    %1550 = vmatpush1.msra.mxu0 %v1371
    %1551 = vmatprep.subr.mxu0 0.0
    %1552 = vmatpush1.msra.mxu0 %v1372
    %1553 = vmatprep.subr.mxu0 0.0
    %1554 = vmatpush1.msra.mxu0 %v1373
    %1555 = vmatprep.subr.mxu0 0.0
    %1556 = vmatpush1.msra.mxu0 %v1374
    %1557 = vmatprep.subr.mxu0 0.0
    %1558 = vmatpush1.msra.mxu0 %v1375
    %1559 = vmatprep.subr.mxu0 0.0
    %1560 = vmatpush1.msra.mxu0 %v1376
    %1561 = vmatprep.subr.mxu0 0.0
    %1562 = vmatpush1.msra.mxu0 %v1377
    %1563 = vmatprep.subr.mxu0 0.0
    %1564 = vmatpush1.msra.mxu0 %v1378
    %1565 = vmatprep.subr.mxu0 0.0
    %1566 = vmatpush1.msra.mxu0 %v1379
    %1567 = vmatprep.subr.mxu0 0.0
    %1568 = vmatpush1.msra.mxu0 %v1380
    %1569 = vmatprep.subr.mxu0 0.0
    %1570 = vmatpush1.msra.mxu0 %v1381
    %1571 = vmatprep.subr.mxu0 0.0
    %1572 = vmatpush1.msra.mxu0 %v1382
    %1573 = vmatprep.subr.mxu0 0.0
    %1574 = vmatpush1.msra.mxu0 %v1383
    %1575 = vmatprep.subr.mxu0 0.0
    %1576 = vmatpush1.msra.mxu0 %v1384
    %1577 = vmatprep.subr.mxu0 0.0
    %1578 = vmatpush1.msra.mxu0 %v1385
    %1579 = vmatprep.subr.mxu0 0.0
    %1580 = vmatpush1.msra.mxu0 %v1386
    %1581 = vmatprep.subr.mxu0 0.0
    %1582 = vmatpush1.msra.mxu0 0.0
    %1583 = vmatprep.subr.mxu0 0.0
    %1584 = vmatpush1.msra.mxu0 0.0
    %1585 = vmatprep.subr.mxu0 0.0
    %1586 = vmatpush1.msra.mxu0 0.0
    %1587 = vmatprep.subr.mxu0 0.0
    %1588 = vmatpush1.msra.mxu0 0.0
    %1589 = vmatprep.subr.mxu0 0.0
    %1590 = vmatpush1.msra.mxu0 0.0
    %1591 = vmatprep.subr.mxu0 0.0
    %1592 = vmatpush1.msra.mxu0 0.0
    %1593 = vmatprep.subr.mxu0 0.0
    %1594 = vmatpush1.msra.mxu0 0.0
    %1595 = vmatprep.subr.mxu0 0.0
    %1596 = vmatpush1.msra.mxu0 0.0
    %1597 = vmatprep.subr.mxu0 0.0
    %1598 = vmatpush1.msra.mxu0 0.0
    %1599 = vmatprep.subr.mxu0 0.0
    %1600 = vmatpush1.msra.mxu0 0.0
    %1601 = vmatprep.subr.mxu0 0.0
    %1602 = vmatpush1.msra.mxu0 0.0
    %1603 = vmatprep.subr.mxu0 0.0
    %1604 = vmatpush1.msra.mxu0 0.0
    %1605 = vmatprep.subr.mxu0 0.0
    %1606 = vmatpush1.msra.mxu0 0.0
    %1607 = vmatprep.subr.mxu0 0.0
    %1608 = vmatpush1.msra.mxu0 0.0
    %1609 = vmatprep.subr.mxu0 0.0
    %1610 = vmatpush1.msra.mxu0 0.0
    %1611 = vmatprep.subr.mxu0 0.0
    %1612 = vmatpush1.msra.mxu0 0.0
    %1613 = vmatprep.mubr.f32.mxu0 0.0
    %1614 = vmatmul.mubr.f32.gmra.mrb[0].mxu0 %v1290
    %v1615 = vpop.f32.mrb[0].mxu0
    %v1616 = vadd.f32 %v1471, %v1615
    %v1617 = vpop.f32.mrb[0].mxu0
    %1618 = vmatprep.mubr.f32.mxu0 0.0
    %1619 = vmatmul.mubr.f32.gmra.mrb[0].mxu0 %v1291
    %v1620 = vpop.f32.mrb[0].mxu0
    %v1621 = vadd.f32 %v1476, %v1620
    %v1622 = vpop.f32.mrb[0].mxu0
    %1623 = vmatprep.mubr.f32.mxu0 0.0
    %1624 = vmatmul.mubr.f32.gmra.mrb[0].mxu0 %v1292
    %v1625 = vpop.f32.mrb[0].mxu0
    %v1626 = vadd.f32 %v1481, %v1625
    %v1627 = vpop.f32.mrb[0].mxu0
    %1628 = vmatprep.mubr.f32.mxu0 0.0
    %1629 = vmatmul.mubr.f32.gmra.mrb[0].mxu0 %v1293
    %v1630 = vpop.f32.mrb[0].mxu0
    %v1631 = vadd.f32 %v1486, %v1630
    %v1632 = vpop.f32.mrb[0].mxu0
    %1633 = vmatprep.mubr.f32.mxu0 0.0
    %1634 = vmatmul.mubr.f32.gmra.mrb[0].mxu0 %v1294
    %v1635 = vpop.f32.mrb[0].mxu0
    %v1636 = vadd.f32 %v1491, %v1635
    %v1637 = vpop.f32.mrb[0].mxu0
    %1638 = vmatprep.mubr.f32.mxu0 0.0
    %1639 = vmatmul.mubr.f32.gmra.mrb[0].mxu0 %v1295
    %v1640 = vpop.f32.mrb[0].mxu0
    %v1641 = vadd.f32 %v1496, %v1640
    %v1642 = vpop.f32.mrb[0].mxu0
    %1643 = vmatprep.mubr.f32.mxu0 0.0
    %1644 = vmatmul.mubr.f32.gmra.mrb[0].mxu0 %v1296
    %v1645 = vpop.f32.mrb[0].mxu0
    %v1646 = vadd.f32 %v1501, %v1645
    %v1647 = vpop.f32.mrb[0].mxu0
    %1648 = vmatprep.mubr.f32.mxu0 0.0
    %1649 = vmatmul.mubr.f32.gmra.mrb[0].mxu0 %v1297
    %v1650 = vpop.f32.mrb[0].mxu0
    %v1651 = vadd.f32 %v1506, %v1650
    %v1652 = vpop.f32.mrb[0].mxu0
    %1653 = vmatprep.mubr.f32.mxu0 0.0
    %1654 = vmatmul.mubr.f32.gmra.mrb[0].mxu0 %v1298
    %v1655 = vpop.f32.mrb[0].mxu0
    %v1656 = vadd.f32 %v1511, %v1655
    %v1657 = vpop.f32.mrb[0].mxu0
    %1658 = vmatprep.mubr.f32.mxu0 0.0
    %1659 = vmatmul.mubr.f32.gmra.mrb[0].mxu0 %v1299
    %v1660 = vpop.f32.mrb[0].mxu0
    %v1661 = vadd.f32 %v1516, %v1660
    %v1662 = vpop.f32.mrb[0].mxu0
    %1663 = vmatprep.mubr.f32.mxu0 0.0
    %1664 = vmatmul.mubr.f32.gmra.mrb[0].mxu0 %v1300
    %v1665 = vpop.f32.mrb[0].mxu0
    %v1666 = vadd.f32 %v1521, %v1665
    %v1667 = vpop.f32.mrb[0].mxu0
    %1668 = vmatprep.mubr.f32.mxu0 0.0
    %1669 = vmatmul.mubr.f32.gmra.mrb[0].mxu0 %v1301
    %v1670 = vpop.f32.mrb[0].mxu0
    %v1671 = vadd.f32 %v1526, %v1670
    %v1672 = vpop.f32.mrb[0].mxu0
    %1673 = vmatprep.mubr.f32.mxu0 0.0
    %1674 = vmatmul.mubr.f32.gmra.mrb[0].mxu0 %v1302
    %v1675 = vpop.f32.mrb[0].mxu0
    %v1676 = vadd.f32 %v1531, %v1675
    %v1677 = vpop.f32.mrb[0].mxu0
    %1678 = vmatprep.mubr.f32.mxu0 0.0
    %1679 = vmatmul.mubr.f32.gmra.mrb[0].mxu0 %v1303
    %v1680 = vpop.f32.mrb[0].mxu0
    %v1681 = vadd.f32 %v1536, %v1680
    %v1682 = vpop.f32.mrb[0].mxu0
    %1683 = vmatprep.mubr.f32.mxu0 0.0
    %1684 = vmatmul.mubr.f32.gmra.mrb[0].mxu0 %v1304
    %v1685 = vpop.f32.mrb[0].mxu0
    %v1686 = vadd.f32 %v1541, %v1685
    %v1687 = vpop.f32.mrb[0].mxu0
    %1688 = vmatprep.mubr.f32.mxu0 0.0
    %1689 = vmatmul.mubr.f32.gmra.mrb[0].mxu0 %v1305
    %v1690 = vpop.f32.mrb[0].mxu0
    %v1691 = vadd.f32 %v1546, %v1690
    %v1692 = vpop.f32.mrb[0].mxu0
    %1693 = vdwg.mxu0
    %s1694 = scalar_lea.vmem [#allocation2], 256
    %v1695 = vld [vmem:[%s1694] sm:$0xff]
    %v1696 = vld [vmem:[%s1694 + $0x8] sm:$0xff]
    %v1697 = vld [vmem:[%s1694 + $0x10] sm:$0xff]
    %v1698 = vld [vmem:[%s1694 + $0x18] sm:$0xff]
    %v1699 = vld [vmem:[%s1694 + $0x20] sm:$0xff]
    %v1700 = vld [vmem:[%s1694 + $0x28] sm:$0xff]
    %v1701 = vld [vmem:[%s1694 + $0x30] sm:$0xff]
    %v1702 = vld [vmem:[%s1694 + $0x38] sm:$0xff]
    %v1703 = vld [vmem:[%s1694 + $0x40] sm:$0xff]
    %v1704 = vld [vmem:[%s1694 + $0x48] sm:$0xff]
    %v1705 = vld [vmem:[%s1694 + $0x50] sm:$0xff]
    %v1706 = vld [vmem:[%s1694 + $0x58] sm:$0xff]
    %v1707 = vld [vmem:[%s1694 + $0x60] sm:$0xff]
    %v1708 = vld [vmem:[%s1694 + $0x68] sm:$0xff]
    %v1709 = vld [vmem:[%s1694 + $0x70] sm:$0xff]
    %v1710 = vld [vmem:[%s1694 + $0x78] sm:$0xff]
    %1711 = vmatprep.subr.mxu0 0.0
    %1712 = vmatpush1.msra.mxu0 %v1695
    %1713 = vmatprep.subr.mxu0 0.0
    %1714 = vmatpush1.msra.mxu0 %v1696
    %1715 = vmatprep.subr.mxu0 0.0
    %1716 = vmatpush1.msra.mxu0 %v1697
    %1717 = vmatprep.subr.mxu0 0.0
    %1718 = vmatpush1.msra.mxu0 %v1698
    %1719 = vmatprep.subr.mxu0 0.0
    %1720 = vmatpush1.msra.mxu0 %v1699
    %1721 = vmatprep.subr.mxu0 0.0
    %1722 = vmatpush1.msra.mxu0 %v1700
    %1723 = vmatprep.subr.mxu0 0.0
    %1724 = vmatpush1.msra.mxu0 %v1701
    %1725 = vmatprep.subr.mxu0 0.0
    %1726 = vmatpush1.msra.mxu0 %v1702
    %1727 = vmatprep.subr.mxu0 0.0
    %1728 = vmatpush1.msra.mxu0 %v1703
    %1729 = vmatprep.subr.mxu0 0.0
    %1730 = vmatpush1.msra.mxu0 %v1704
    %1731 = vmatprep.subr.mxu0 0.0
    %1732 = vmatpush1.msra.mxu0 %v1705
    %1733 = vmatprep.subr.mxu0 0.0
    %1734 = vmatpush1.msra.mxu0 %v1706
    %1735 = vmatprep.subr.mxu0 0.0
    %1736 = vmatpush1.msra.mxu0 %v1707
    %1737 = vmatprep.subr.mxu0 0.0
    %1738 = vmatpush1.msra.mxu0 %v1708
    %1739 = vmatprep.subr.mxu0 0.0
    %1740 = vmatpush1.msra.mxu0 %v1709
    %1741 = vmatprep.subr.mxu0 0.0
    %1742 = vmatpush1.msra.mxu0 %v1710
    %1743 = vmatprep.subr.mxu0 0.0
    %1744 = vmatpush1.msra.mxu0 0.0
    %1745 = vmatprep.subr.mxu0 0.0
    %1746 = vmatpush1.msra.mxu0 0.0
    %1747 = vmatprep.subr.mxu0 0.0
    %1748 = vmatpush1.msra.mxu0 0.0
    %1749 = vmatprep.subr.mxu0 0.0
    %1750 = vmatpush1.msra.mxu0 0.0
    %1751 = vmatprep.subr.mxu0 0.0
    %1752 = vmatpush1.msra.mxu0 0.0
    %1753 = vmatprep.subr.mxu0 0.0
    %1754 = vmatpush1.msra.mxu0 0.0
    %1755 = vmatprep.subr.mxu0 0.0
    %1756 = vmatpush1.msra.mxu0 0.0
    %1757 = vmatprep.subr.mxu0 0.0
    %1758 = vmatpush1.msra.mxu0 0.0
    %1759 = vmatprep.subr.mxu0 0.0
    %1760 = vmatpush1.msra.mxu0 0.0
    %1761 = vmatprep.subr.mxu0 0.0
    %1762 = vmatpush1.msra.mxu0 0.0
    %1763 = vmatprep.subr.mxu0 0.0
    %1764 = vmatpush1.msra.mxu0 0.0
    %1765 = vmatprep.subr.mxu0 0.0
    %1766 = vmatpush1.msra.mxu0 0.0
    %1767 = vmatprep.subr.mxu0 0.0
    %1768 = vmatpush1.msra.mxu0 0.0
    %1769 = vmatprep.subr.mxu0 0.0
    %1770 = vmatpush1.msra.mxu0 0.0
    %1771 = vmatprep.subr.mxu0 0.0
    %1772 = vmatpush1.msra.mxu0 0.0
    %1773 = vmatprep.subr.mxu0 0.0
    %1774 = vmatpush1.msra.mxu0 0.0
    %1775 = vmatprep.mubr.f32.mxu0 0.0
    %1776 = vmatmul.mubr.f32.gmra.mrb[0].mxu0 %v1355
    %v1777 = vpop.f32.mrb[0].mxu0
    %v1778 = vadd.f32 0.0, %v1777
    %v1779 = vpop.f32.mrb[0].mxu0
    %1780 = vmatprep.mubr.f32.mxu0 0.0
    %1781 = vmatmul.mubr.f32.gmra.mrb[0].mxu0 %v1356
    %v1782 = vpop.f32.mrb[0].mxu0
    %v1783 = vadd.f32 0.0, %v1782
    %v1784 = vpop.f32.mrb[0].mxu0
    %1785 = vmatprep.mubr.f32.mxu0 0.0
    %1786 = vmatmul.mubr.f32.gmra.mrb[0].mxu0 %v1357
    %v1787 = vpop.f32.mrb[0].mxu0
    %v1788 = vadd.f32 0.0, %v1787
    %v1789 = vpop.f32.mrb[0].mxu0
    %1790 = vmatprep.mubr.f32.mxu0 0.0
    %1791 = vmatmul.mubr.f32.gmra.mrb[0].mxu0 %v1358
    %v1792 = vpop.f32.mrb[0].mxu0
    %v1793 = vadd.f32 0.0, %v1792
    %v1794 = vpop.f32.mrb[0].mxu0
    %1795 = vmatprep.mubr.f32.mxu0 0.0
    %1796 = vmatmul.mubr.f32.gmra.mrb[0].mxu0 %v1359
    %v1797 = vpop.f32.mrb[0].mxu0
    %v1798 = vadd.f32 0.0, %v1797
    %v1799 = vpop.f32.mrb[0].mxu0
    %1800 = vmatprep.mubr.f32.mxu0 0.0
    %1801 = vmatmul.mubr.f32.gmra.mrb[0].mxu0 %v1360
    %v1802 = vpop.f32.mrb[0].mxu0
    %v1803 = vadd.f32 0.0, %v1802
    %v1804 = vpop.f32.mrb[0].mxu0
    %1805 = vmatprep.mubr.f32.mxu0 0.0
    %1806 = vmatmul.mubr.f32.gmra.mrb[0].mxu0 %v1361
    %v1807 = vpop.f32.mrb[0].mxu0
    %v1808 = vadd.f32 0.0, %v1807
    %v1809 = vpop.f32.mrb[0].mxu0
    %1810 = vmatprep.mubr.f32.mxu0 0.0
    %1811 = vmatmul.mubr.f32.gmra.mrb[0].mxu0 %v1362
    %v1812 = vpop.f32.mrb[0].mxu0
    %v1813 = vadd.f32 0.0, %v1812
    %v1814 = vpop.f32.mrb[0].mxu0
    %1815 = vmatprep.mubr.f32.mxu0 0.0
    %1816 = vmatmul.mubr.f32.gmra.mrb[0].mxu0 %v1363
    %v1817 = vpop.f32.mrb[0].mxu0
    %v1818 = vadd.f32 0.0, %v1817
    %v1819 = vpop.f32.mrb[0].mxu0
    %1820 = vmatprep.mubr.f32.mxu0 0.0
    %1821 = vmatmul.mubr.f32.gmra.mrb[0].mxu0 %v1364
    %v1822 = vpop.f32.mrb[0].mxu0
    %v1823 = vadd.f32 0.0, %v1822
    %v1824 = vpop.f32.mrb[0].mxu0
    %1825 = vmatprep.mubr.f32.mxu0 0.0
    %1826 = vmatmul.mubr.f32.gmra.mrb[0].mxu0 %v1365
    %v1827 = vpop.f32.mrb[0].mxu0
    %v1828 = vadd.f32 0.0, %v1827
    %v1829 = vpop.f32.mrb[0].mxu0
    %1830 = vmatprep.mubr.f32.mxu0 0.0
    %1831 = vmatmul.mubr.f32.gmra.mrb[0].mxu0 %v1366
    %v1832 = vpop.f32.mrb[0].mxu0
    %v1833 = vadd.f32 0.0, %v1832
    %v1834 = vpop.f32.mrb[0].mxu0
    %1835 = vmatprep.mubr.f32.mxu0 0.0
    %1836 = vmatmul.mubr.f32.gmra.mrb[0].mxu0 %v1367
    %v1837 = vpop.f32.mrb[0].mxu0
    %v1838 = vadd.f32 0.0, %v1837
    %v1839 = vpop.f32.mrb[0].mxu0
    %1840 = vmatprep.mubr.f32.mxu0 0.0
    %1841 = vmatmul.mubr.f32.gmra.mrb[0].mxu0 %v1368
    %v1842 = vpop.f32.mrb[0].mxu0
    %v1843 = vadd.f32 0.0, %v1842
    %v1844 = vpop.f32.mrb[0].mxu0
    %1845 = vmatprep.mubr.f32.mxu0 0.0
    %1846 = vmatmul.mubr.f32.gmra.mrb[0].mxu0 %v1369
    %v1847 = vpop.f32.mrb[0].mxu0
    %v1848 = vadd.f32 0.0, %v1847
    %v1849 = vpop.f32.mrb[0].mxu0
    %1850 = vmatprep.mubr.f32.mxu0 0.0
    %1851 = vmatmul.mubr.f32.gmra.mrb[0].mxu0 %v1370
    %v1852 = vpop.f32.mrb[0].mxu0
    %v1853 = vadd.f32 0.0, %v1852
    %v1854 = vpop.f32.mrb[0].mxu0
    %1855 = vdwg.mxu0
    %v1856 = vadd.f32 %v1616, %v1778
    %v1857 = vadd.f32 %v1621, %v1783
    %v1858 = vadd.f32 %v1626, %v1788
    %v1859 = vadd.f32 %v1631, %v1793
    %v1860 = vadd.f32 %v1636, %v1798
    %v1861 = vadd.f32 %v1641, %v1803
    %v1862 = vadd.f32 %v1646, %v1808
    %v1863 = vadd.f32 %v1651, %v1813
    %v1864 = vadd.f32 %v1656, %v1818
    %v1865 = vadd.f32 %v1661, %v1823
    %v1866 = vadd.f32 %v1666, %v1828
    %v1867 = vadd.f32 %v1671, %v1833
    %v1868 = vadd.f32 %v1676, %v1838
    %v1869 = vadd.f32 %v1681, %v1843
    %v1870 = vadd.f32 %v1686, %v1848
    %v1871 = vadd.f32 %v1691, %v1853
    %v1872 = vld [vmem:[%s5] sm:$0x1]
    %v1874 = vlaneseq
    %v1875 = vshrl.u32 %v1874, 7
    %v1876 = vsub.s32 0, %v1875
    %v1877 = vrot.slane %v1872, %v1876
    %v1879 = vadd.f32 %v1856, %v1877
    %v1880 = vadd.f32 %v1857, %v1877
    %v1881 = vadd.f32 %v1858, %v1877
    %v1882 = vadd.f32 %v1859, %v1877
    %v1883 = vadd.f32 %v1860, %v1877
    %v1884 = vadd.f32 %v1861, %v1877
    %v1885 = vadd.f32 %v1862, %v1877
    %v1886 = vadd.f32 %v1863, %v1877
    %v1887 = vadd.f32 %v1864, %v1877
    %v1888 = vadd.f32 %v1865, %v1877
    %v1889 = vadd.f32 %v1866, %v1877
    %v1890 = vadd.f32 %v1867, %v1877
    %v1891 = vadd.f32 %v1868, %v1877
    %v1892 = vadd.f32 %v1869, %v1877
    %v1893 = vadd.f32 %v1870, %v1877
    %v1894 = vadd.f32 %v1871, %v1877
    %v1895 = vmul.f32 %v1879, 0.5
    %v1896 = vmul.f32 %v1880, 0.5
    %v1897 = vmul.f32 %v1881, 0.5
    %v1898 = vmul.f32 %v1882, 0.5
    %v1899 = vmul.f32 %v1883, 0.5
    %v1900 = vmul.f32 %v1884, 0.5
    %v1901 = vmul.f32 %v1885, 0.5
    %v1902 = vmul.f32 %v1886, 0.5
    %v1903 = vmul.f32 %v1887, 0.5
    %v1904 = vmul.f32 %v1888, 0.5
    %v1905 = vmul.f32 %v1889, 0.5
    %v1906 = vmul.f32 %v1890, 0.5
    %v1907 = vmul.f32 %v1891, 0.5
    %v1908 = vmul.f32 %v1892, 0.5
    %v1909 = vmul.f32 %v1893, 0.5
    %v1910 = vmul.f32 %v1894, 0.5
    %v1911 = vmul.f32 %v1879, 0.70710677
    %v1912 = vmul.f32 %v1880, 0.70710677
    %v1913 = vmul.f32 %v1881, 0.70710677
    %v1914 = vmul.f32 %v1882, 0.70710677
    %v1915 = vmul.f32 %v1883, 0.70710677
    %v1916 = vmul.f32 %v1884, 0.70710677
    %v1917 = vmul.f32 %v1885, 0.70710677
    %v1918 = vmul.f32 %v1886, 0.70710677
    %v1919 = vmul.f32 %v1887, 0.70710677
    %v1920 = vmul.f32 %v1888, 0.70710677
    %v1921 = vmul.f32 %v1889, 0.70710677
    %v1922 = vmul.f32 %v1890, 0.70710677
    %v1923 = vmul.f32 %v1891, 0.70710677
    %v1924 = vmul.f32 %v1892, 0.70710677
    %v1925 = vmul.f32 %v1893, 0.70710677
    %v1926 = vmul.f32 %v1894, 0.70710677
    %v1927 = verf.f32.pop %v1911
    %v1928 = verf.f32.pop %v1912
    %v1929 = verf.f32.pop %v1913
    %v1930 = verf.f32.pop %v1914
    %v1931 = verf.f32.pop %v1915
    %v1932 = verf.f32.pop %v1916
    %v1933 = verf.f32.pop %v1917
    %v1934 = verf.f32.pop %v1918
    %v1935 = verf.f32.pop %v1919
    %v1936 = verf.f32.pop %v1920
    %v1937 = verf.f32.pop %v1921
    %v1938 = verf.f32.pop %v1922
    %v1939 = verf.f32.pop %v1923
    %v1940 = verf.f32.pop %v1924
    %v1941 = verf.f32.pop %v1925
    %v1942 = verf.f32.pop %v1926
    %v1943 = vadd.f32 %v1927, 1.0
    %v1944 = vadd.f32 %v1928, 1.0
    %v1945 = vadd.f32 %v1929, 1.0
    %v1946 = vadd.f32 %v1930, 1.0
    %v1947 = vadd.f32 %v1931, 1.0
    %v1948 = vadd.f32 %v1932, 1.0
    %v1949 = vadd.f32 %v1933, 1.0
    %v1950 = vadd.f32 %v1934, 1.0
    %v1951 = vadd.f32 %v1935, 1.0
    %v1952 = vadd.f32 %v1936, 1.0
    %v1953 = vadd.f32 %v1937, 1.0
    %v1954 = vadd.f32 %v1938, 1.0
    %v1955 = vadd.f32 %v1939, 1.0
    %v1956 = vadd.f32 %v1940, 1.0
    %v1957 = vadd.f32 %v1941, 1.0
    %v1958 = vadd.f32 %v1942, 1.0
    %v1959 = vmul.f32 %v1895, %v1943
    %v1960 = vmul.f32 %v1896, %v1944
    %v1961 = vmul.f32 %v1897, %v1945
    %v1962 = vmul.f32 %v1898, %v1946
    %v1963 = vmul.f32 %v1899, %v1947
    %v1964 = vmul.f32 %v1900, %v1948
    %v1965 = vmul.f32 %v1901, %v1949
    %v1966 = vmul.f32 %v1902, %v1950
    %v1967 = vmul.f32 %v1903, %v1951
    %v1968 = vmul.f32 %v1904, %v1952
    %v1969 = vmul.f32 %v1905, %v1953
    %v1970 = vmul.f32 %v1906, %v1954
    %v1971 = vmul.f32 %v1907, %v1955
    %v1972 = vmul.f32 %v1908, %v1956
    %v1973 = vmul.f32 %v1909, %v1957
    %v1974 = vmul.f32 %v1910, %v1958
    %v1976 = vrot.slane %v1974, 7
    %v1993 = vrot.slane %v1959, 7
    %v1994 = vrot.slane %v1960, 7
    %v1995 = vsel %vm397, %v1993, %v1994
    %v1996 = vrot.slane %v1961, 7
    %v1997 = vsel %vm397, %v1994, %v1996
    %v1998 = vrot.slane %v1962, 7
    %v1999 = vsel %vm397, %v1996, %v1998
    %v2000 = vrot.slane %v1963, 7
    %v2001 = vsel %vm397, %v1998, %v2000
    %v2002 = vrot.slane %v1964, 7
    %v2003 = vsel %vm397, %v2000, %v2002
    %v2004 = vrot.slane %v1965, 7
    %v2005 = vsel %vm397, %v2002, %v2004
    %v2006 = vrot.slane %v1966, 7
    %v2007 = vsel %vm397, %v2004, %v2006
    %v2008 = vrot.slane %v1967, 7
    %v2009 = vsel %vm397, %v2006, %v2008
    %v2010 = vrot.slane %v1968, 7
    %v2011 = vsel %vm397, %v2008, %v2010
    %v2012 = vrot.slane %v1969, 7
    %v2013 = vsel %vm397, %v2010, %v2012
    %v2014 = vrot.slane %v1970, 7
    %v2015 = vsel %vm397, %v2012, %v2014
    %v2016 = vrot.slane %v1971, 7
    %v2017 = vsel %vm397, %v2014, %v2016
    %v2018 = vrot.slane %v1972, 7
    %v2019 = vsel %vm397, %v2016, %v2018
    %v2020 = vrot.slane %v1973, 7
    %v2021 = vsel %vm397, %v2018, %v2020
    %v2022 = vsel %vm397, %v2020, %v1976
    %v2039 = vsel %vm397, %v1976, %v1993
    %v2040 = vmul.f32 %v299, %v2039
    %v2041 = vmul.f32 %v300, %v1995
    %v2042 = vmul.f32 %v301, %v1997
    %v2043 = vmul.f32 %v302, %v1999
    %v2044 = vmul.f32 %v303, %v2001
    %v2045 = vmul.f32 %v304, %v2003
    %v2046 = vmul.f32 %v305, %v2005
    %v2047 = vmul.f32 %v306, %v2007
    %v2048 = vmul.f32 %v307, %v2009
    %v2049 = vmul.f32 %v308, %v2011
    %v2050 = vmul.f32 %v309, %v2013
    %v2051 = vmul.f32 %v310, %v2015
    %v2052 = vmul.f32 %v311, %v2017
    %v2053 = vmul.f32 %v312, %v2019
    %v2054 = vmul.f32 %v313, %v2021
    %v2055 = vmul.f32 %v314, %v2022
    %v2056 = vrot.slane %v1959, 1
    %v2057 = vrot.slane %v1960, 1
    %v2058 = vsel %vm461, %v2056, %v2057
    %v2059 = vrot.slane %v1961, 1
    %v2060 = vsel %vm461, %v2057, %v2059
    %v2061 = vrot.slane %v1962, 1
    %v2062 = vsel %vm461, %v2059, %v2061
    %v2063 = vrot.slane %v1963, 1
    %v2064 = vsel %vm461, %v2061, %v2063
    %v2065 = vrot.slane %v1964, 1
    %v2066 = vsel %vm461, %v2063, %v2065
    %v2067 = vrot.slane %v1965, 1
    %v2068 = vsel %vm461, %v2065, %v2067
    %v2069 = vrot.slane %v1966, 1
    %v2070 = vsel %vm461, %v2067, %v2069
    %v2071 = vrot.slane %v1967, 1
    %v2072 = vsel %vm461, %v2069, %v2071
    %v2073 = vrot.slane %v1968, 1
    %v2074 = vsel %vm461, %v2071, %v2073
    %v2075 = vrot.slane %v1969, 1
    %v2076 = vsel %vm461, %v2073, %v2075
    %v2077 = vrot.slane %v1970, 1
    %v2078 = vsel %vm461, %v2075, %v2077
    %v2079 = vrot.slane %v1971, 1
    %v2080 = vsel %vm461, %v2077, %v2079
    %v2081 = vrot.slane %v1972, 1
    %v2082 = vsel %vm461, %v2079, %v2081
    %v2083 = vrot.slane %v1973, 1
    %v2084 = vsel %vm461, %v2081, %v2083
    %v2085 = vrot.slane %v1974, 1
    %v2086 = vsel %vm461, %v2083, %v2085
    %v2104 = vsel %vm461, %v2085, %v2056
    %v2105 = vmul.f32 %v347, %v2058
    %v2106 = vmul.f32 %v348, %v2060
    %v2107 = vmul.f32 %v349, %v2062
    %v2108 = vmul.f32 %v350, %v2064
    %v2109 = vmul.f32 %v351, %v2066
    %v2110 = vmul.f32 %v352, %v2068
    %v2111 = vmul.f32 %v353, %v2070
    %v2112 = vmul.f32 %v354, %v2072
    %v2113 = vmul.f32 %v355, %v2074
    %v2114 = vmul.f32 %v356, %v2076
    %v2115 = vmul.f32 %v357, %v2078
    %v2116 = vmul.f32 %v358, %v2080
    %v2117 = vmul.f32 %v359, %v2082
    %v2118 = vmul.f32 %v360, %v2084
    %v2119 = vmul.f32 %v361, %v2086
    %v2120 = vmul.f32 %v362, %v2104
    %v2121 = vld [vmem:[#allocation5] sm:$0xff]
    %v2122 = vld [vmem:[#allocation5 + $0x8] sm:$0xff]
    %v2123 = vld [vmem:[#allocation5 + $0x10] sm:$0xff]
    %v2124 = vld [vmem:[#allocation5 + $0x18] sm:$0xff]
    %v2125 = vld [vmem:[#allocation5 + $0x20] sm:$0xff]
    %v2126 = vld [vmem:[#allocation5 + $0x28] sm:$0xff]
    %v2127 = vld [vmem:[#allocation5 + $0x30] sm:$0xff]
    %v2128 = vld [vmem:[#allocation5 + $0x38] sm:$0xff]
    %v2129 = vld [vmem:[#allocation5 + $0x40] sm:$0xff]
    %v2130 = vld [vmem:[#allocation5 + $0x48] sm:$0xff]
    %v2131 = vld [vmem:[#allocation5 + $0x50] sm:$0xff]
    %v2132 = vld [vmem:[#allocation5 + $0x58] sm:$0xff]
    %v2133 = vld [vmem:[#allocation5 + $0x60] sm:$0xff]
    %v2134 = vld [vmem:[#allocation5 + $0x68] sm:$0xff]
    %v2135 = vld [vmem:[#allocation5 + $0x70] sm:$0xff]
    %v2136 = vld [vmem:[#allocation5 + $0x78] sm:$0xff]
    %s2137 = scalar_lea.vmem [#allocation5], 128
    %v2138 = vld [vmem:[%s2137] sm:$0xff]
    %v2139 = vld [vmem:[%s2137 + $0x8] sm:$0xff]
    %v2140 = vld [vmem:[%s2137 + $0x10] sm:$0xff]
    %v2141 = vld [vmem:[%s2137 + $0x18] sm:$0xff]
    %v2142 = vld [vmem:[%s2137 + $0x20] sm:$0xff]
    %v2143 = vld [vmem:[%s2137 + $0x28] sm:$0xff]
    %v2144 = vld [vmem:[%s2137 + $0x30] sm:$0xff]
    %v2145 = vld [vmem:[%s2137 + $0x38] sm:$0xff]
    %v2146 = vld [vmem:[%s2137 + $0x40] sm:$0xff]
    %v2147 = vld [vmem:[%s2137 + $0x48] sm:$0xff]
    %v2148 = vld [vmem:[%s2137 + $0x50] sm:$0xff]
    %v2149 = vld [vmem:[%s2137 + $0x58] sm:$0xff]
    %v2150 = vld [vmem:[%s2137 + $0x60] sm:$0xff]
    %v2151 = vld [vmem:[%s2137 + $0x68] sm:$0xff]
    %v2152 = vld [vmem:[%s2137 + $0x70] sm:$0xff]
    %v2153 = vld [vmem:[%s2137 + $0x78] sm:$0xff]
    %2154 = vmatprep.subr.mxu0 0.0
    %2155 = vmatpush1.msra.mxu0 %v2138
    %2156 = vmatprep.subr.mxu0 0.0
    %2157 = vmatpush1.msra.mxu0 %v2139
    %2158 = vmatprep.subr.mxu0 0.0
    %2159 = vmatpush1.msra.mxu0 %v2140
    %2160 = vmatprep.subr.mxu0 0.0
    %2161 = vmatpush1.msra.mxu0 %v2141
    %2162 = vmatprep.subr.mxu0 0.0
    %2163 = vmatpush1.msra.mxu0 %v2142
    %2164 = vmatprep.subr.mxu0 0.0
    %2165 = vmatpush1.msra.mxu0 %v2143
    %2166 = vmatprep.subr.mxu0 0.0
    %2167 = vmatpush1.msra.mxu0 %v2144
    %2168 = vmatprep.subr.mxu0 0.0
    %2169 = vmatpush1.msra.mxu0 %v2145
    %2170 = vmatprep.subr.mxu0 0.0
    %2171 = vmatpush1.msra.mxu0 %v2146
    %2172 = vmatprep.subr.mxu0 0.0
    %2173 = vmatpush1.msra.mxu0 %v2147
    %2174 = vmatprep.subr.mxu0 0.0
    %2175 = vmatpush1.msra.mxu0 %v2148
    %2176 = vmatprep.subr.mxu0 0.0
    %2177 = vmatpush1.msra.mxu0 %v2149
    %2178 = vmatprep.subr.mxu0 0.0
    %2179 = vmatpush1.msra.mxu0 %v2150
    %2180 = vmatprep.subr.mxu0 0.0
    %2181 = vmatpush1.msra.mxu0 %v2151
    %2182 = vmatprep.subr.mxu0 0.0
    %2183 = vmatpush1.msra.mxu0 %v2152
    %2184 = vmatprep.subr.mxu0 0.0
    %2185 = vmatpush1.msra.mxu0 %v2153
    %2186 = vmatprep.subr.mxu0 0.0
    %2187 = vmatpush1.msra.mxu0 0.0
    %2188 = vmatprep.subr.mxu0 0.0
    %2189 = vmatpush1.msra.mxu0 0.0
    %2190 = vmatprep.subr.mxu0 0.0
    %2191 = vmatpush1.msra.mxu0 0.0
    %2192 = vmatprep.subr.mxu0 0.0
    %2193 = vmatpush1.msra.mxu0 0.0
    %2194 = vmatprep.subr.mxu0 0.0
    %2195 = vmatpush1.msra.mxu0 0.0
    %2196 = vmatprep.subr.mxu0 0.0
    %2197 = vmatpush1.msra.mxu0 0.0
    %2198 = vmatprep.subr.mxu0 0.0
    %2199 = vmatpush1.msra.mxu0 0.0
    %2200 = vmatprep.subr.mxu0 0.0
    %2201 = vmatpush1.msra.mxu0 0.0
    %2202 = vmatprep.subr.mxu0 0.0
    %2203 = vmatpush1.msra.mxu0 0.0
    %2204 = vmatprep.subr.mxu0 0.0
    %2205 = vmatpush1.msra.mxu0 0.0
    %2206 = vmatprep.subr.mxu0 0.0
    %2207 = vmatpush1.msra.mxu0 0.0
    %2208 = vmatprep.subr.mxu0 0.0
    %2209 = vmatpush1.msra.mxu0 0.0
    %2210 = vmatprep.subr.mxu0 0.0
    %2211 = vmatpush1.msra.mxu0 0.0
    %2212 = vmatprep.subr.mxu0 0.0
    %2213 = vmatpush1.msra.mxu0 0.0
    %2214 = vmatprep.subr.mxu0 0.0
    %2215 = vmatpush1.msra.mxu0 0.0
    %2216 = vmatprep.subr.mxu0 0.0
    %2217 = vmatpush1.msra.mxu0 0.0
    %2218 = vmatprep.mubr.f32.mxu0 0.0
    %2219 = vmatmul.mubr.f32.gmra.mrb[0].mxu0 %v1959
    %v2220 = vpop.f32.mrb[0].mxu0
    %v2221 = vadd.f32 0.0, %v2220
    %v2222 = vpop.f32.mrb[0].mxu0
    %2223 = vmatprep.mubr.f32.mxu0 0.0
    %2224 = vmatmul.mubr.f32.gmra.mrb[0].mxu0 %v1960
    %v2225 = vpop.f32.mrb[0].mxu0
    %v2226 = vadd.f32 0.0, %v2225
    %v2227 = vpop.f32.mrb[0].mxu0
    %2228 = vmatprep.mubr.f32.mxu0 0.0
    %2229 = vmatmul.mubr.f32.gmra.mrb[0].mxu0 %v1961
    %v2230 = vpop.f32.mrb[0].mxu0
    %v2231 = vadd.f32 0.0, %v2230
    %v2232 = vpop.f32.mrb[0].mxu0
    %2233 = vmatprep.mubr.f32.mxu0 0.0
    %2234 = vmatmul.mubr.f32.gmra.mrb[0].mxu0 %v1962
    %v2235 = vpop.f32.mrb[0].mxu0
    %v2236 = vadd.f32 0.0, %v2235
    %v2237 = vpop.f32.mrb[0].mxu0
    %2238 = vmatprep.mubr.f32.mxu0 0.0
    %2239 = vmatmul.mubr.f32.gmra.mrb[0].mxu0 %v1963
    %v2240 = vpop.f32.mrb[0].mxu0
    %v2241 = vadd.f32 0.0, %v2240
    %v2242 = vpop.f32.mrb[0].mxu0
    %2243 = vmatprep.mubr.f32.mxu0 0.0
    %2244 = vmatmul.mubr.f32.gmra.mrb[0].mxu0 %v1964
    %v2245 = vpop.f32.mrb[0].mxu0
    %v2246 = vadd.f32 0.0, %v2245
    %v2247 = vpop.f32.mrb[0].mxu0
    %2248 = vmatprep.mubr.f32.mxu0 0.0
    %2249 = vmatmul.mubr.f32.gmra.mrb[0].mxu0 %v1965
    %v2250 = vpop.f32.mrb[0].mxu0
    %v2251 = vadd.f32 0.0, %v2250
    %v2252 = vpop.f32.mrb[0].mxu0
    %2253 = vmatprep.mubr.f32.mxu0 0.0
    %2254 = vmatmul.mubr.f32.gmra.mrb[0].mxu0 %v1966
    %v2255 = vpop.f32.mrb[0].mxu0
    %v2256 = vadd.f32 0.0, %v2255
    %v2257 = vpop.f32.mrb[0].mxu0
    %2258 = vmatprep.mubr.f32.mxu0 0.0
    %2259 = vmatmul.mubr.f32.gmra.mrb[0].mxu0 %v1967
    %v2260 = vpop.f32.mrb[0].mxu0
    %v2261 = vadd.f32 0.0, %v2260
    %v2262 = vpop.f32.mrb[0].mxu0
    %2263 = vmatprep.mubr.f32.mxu0 0.0
    %2264 = vmatmul.mubr.f32.gmra.mrb[0].mxu0 %v1968
    %v2265 = vpop.f32.mrb[0].mxu0
    %v2266 = vadd.f32 0.0, %v2265
    %v2267 = vpop.f32.mrb[0].mxu0
    %2268 = vmatprep.mubr.f32.mxu0 0.0
    %2269 = vmatmul.mubr.f32.gmra.mrb[0].mxu0 %v1969
    %v2270 = vpop.f32.mrb[0].mxu0
    %v2271 = vadd.f32 0.0, %v2270
    %v2272 = vpop.f32.mrb[0].mxu0
    %2273 = vmatprep.mubr.f32.mxu0 0.0
    %2274 = vmatmul.mubr.f32.gmra.mrb[0].mxu0 %v1970
    %v2275 = vpop.f32.mrb[0].mxu0
    %v2276 = vadd.f32 0.0, %v2275
    %v2277 = vpop.f32.mrb[0].mxu0
    %2278 = vmatprep.mubr.f32.mxu0 0.0
    %2279 = vmatmul.mubr.f32.gmra.mrb[0].mxu0 %v1971
    %v2280 = vpop.f32.mrb[0].mxu0
    %v2281 = vadd.f32 0.0, %v2280
    %v2282 = vpop.f32.mrb[0].mxu0
    %2283 = vmatprep.mubr.f32.mxu0 0.0
    %2284 = vmatmul.mubr.f32.gmra.mrb[0].mxu0 %v1972
    %v2285 = vpop.f32.mrb[0].mxu0
    %v2286 = vadd.f32 0.0, %v2285
    %v2287 = vpop.f32.mrb[0].mxu0
    %2288 = vmatprep.mubr.f32.mxu0 0.0
    %2289 = vmatmul.mubr.f32.gmra.mrb[0].mxu0 %v1973
    %v2290 = vpop.f32.mrb[0].mxu0
    %v2291 = vadd.f32 0.0, %v2290
    %v2292 = vpop.f32.mrb[0].mxu0
    %2293 = vmatprep.mubr.f32.mxu0 0.0
    %2294 = vmatmul.mubr.f32.gmra.mrb[0].mxu0 %v1974
    %v2295 = vpop.f32.mrb[0].mxu0
    %v2296 = vadd.f32 0.0, %v2295
    %v2297 = vpop.f32.mrb[0].mxu0
    %2298 = vdwg.mxu0
    %2299 = vmatprep.subr.mxu0 0.0
    %2300 = vmatpush1.msra.mxu0 %v2121
    %2301 = vmatprep.subr.mxu0 0.0
    %2302 = vmatpush1.msra.mxu0 %v2122
    %2303 = vmatprep.subr.mxu0 0.0
    %2304 = vmatpush1.msra.mxu0 %v2123
    %2305 = vmatprep.subr.mxu0 0.0
    %2306 = vmatpush1.msra.mxu0 %v2124
    %2307 = vmatprep.subr.mxu0 0.0
    %2308 = vmatpush1.msra.mxu0 %v2125
    %2309 = vmatprep.subr.mxu0 0.0
    %2310 = vmatpush1.msra.mxu0 %v2126
    %2311 = vmatprep.subr.mxu0 0.0
    %2312 = vmatpush1.msra.mxu0 %v2127
    %2313 = vmatprep.subr.mxu0 0.0
    %2314 = vmatpush1.msra.mxu0 %v2128
    %2315 = vmatprep.subr.mxu0 0.0
    %2316 = vmatpush1.msra.mxu0 %v2129
    %2317 = vmatprep.subr.mxu0 0.0
    %2318 = vmatpush1.msra.mxu0 %v2130
    %2319 = vmatprep.subr.mxu0 0.0
    %2320 = vmatpush1.msra.mxu0 %v2131
    %2321 = vmatprep.subr.mxu0 0.0
    %2322 = vmatpush1.msra.mxu0 %v2132
    %2323 = vmatprep.subr.mxu0 0.0
    %2324 = vmatpush1.msra.mxu0 %v2133
    %2325 = vmatprep.subr.mxu0 0.0
    %2326 = vmatpush1.msra.mxu0 %v2134
    %2327 = vmatprep.subr.mxu0 0.0
    %2328 = vmatpush1.msra.mxu0 %v2135
    %2329 = vmatprep.subr.mxu0 0.0
    %2330 = vmatpush1.msra.mxu0 %v2136
    %2331 = vmatprep.subr.mxu0 0.0
    %2332 = vmatpush1.msra.mxu0 0.0
    %2333 = vmatprep.subr.mxu0 0.0
    %2334 = vmatpush1.msra.mxu0 0.0
    %2335 = vmatprep.subr.mxu0 0.0
    %2336 = vmatpush1.msra.mxu0 0.0
    %2337 = vmatprep.subr.mxu0 0.0
    %2338 = vmatpush1.msra.mxu0 0.0
    %2339 = vmatprep.subr.mxu0 0.0
    %2340 = vmatpush1.msra.mxu0 0.0
    %2341 = vmatprep.subr.mxu0 0.0
    %2342 = vmatpush1.msra.mxu0 0.0
    %2343 = vmatprep.subr.mxu0 0.0
    %2344 = vmatpush1.msra.mxu0 0.0
    %2345 = vmatprep.subr.mxu0 0.0
    %2346 = vmatpush1.msra.mxu0 0.0
    %2347 = vmatprep.subr.mxu0 0.0
    %2348 = vmatpush1.msra.mxu0 0.0
    %2349 = vmatprep.subr.mxu0 0.0
    %2350 = vmatpush1.msra.mxu0 0.0
    %2351 = vmatprep.subr.mxu0 0.0
    %2352 = vmatpush1.msra.mxu0 0.0
    %2353 = vmatprep.subr.mxu0 0.0
    %2354 = vmatpush1.msra.mxu0 0.0
    %2355 = vmatprep.subr.mxu0 0.0
    %2356 = vmatpush1.msra.mxu0 0.0
    %2357 = vmatprep.subr.mxu0 0.0
    %2358 = vmatpush1.msra.mxu0 0.0
    %2359 = vmatprep.subr.mxu0 0.0
    %2360 = vmatpush1.msra.mxu0 0.0
    %2361 = vmatprep.subr.mxu0 0.0
    %2362 = vmatpush1.msra.mxu0 0.0
    %2363 = vmatprep.mubr.f32.mxu0 0.0
    %2364 = vmatmul.mubr.f32.gmra.mrb[0].mxu0 %v2040
    %v2365 = vpop.f32.mrb[0].mxu0
    %v2366 = vadd.f32 %v2221, %v2365
    %v2367 = vpop.f32.mrb[0].mxu0
    %2368 = vmatprep.mubr.f32.mxu0 0.0
    %2369 = vmatmul.mubr.f32.gmra.mrb[0].mxu0 %v2041
    %v2370 = vpop.f32.mrb[0].mxu0
    %v2371 = vadd.f32 %v2226, %v2370
    %v2372 = vpop.f32.mrb[0].mxu0
    %2373 = vmatprep.mubr.f32.mxu0 0.0
    %2374 = vmatmul.mubr.f32.gmra.mrb[0].mxu0 %v2042
    %v2375 = vpop.f32.mrb[0].mxu0
    %v2376 = vadd.f32 %v2231, %v2375
    %v2377 = vpop.f32.mrb[0].mxu0
    %2378 = vmatprep.mubr.f32.mxu0 0.0
    %2379 = vmatmul.mubr.f32.gmra.mrb[0].mxu0 %v2043
    %v2380 = vpop.f32.mrb[0].mxu0
    %v2381 = vadd.f32 %v2236, %v2380
    %v2382 = vpop.f32.mrb[0].mxu0
    %2383 = vmatprep.mubr.f32.mxu0 0.0
    %2384 = vmatmul.mubr.f32.gmra.mrb[0].mxu0 %v2044
    %v2385 = vpop.f32.mrb[0].mxu0
    %v2386 = vadd.f32 %v2241, %v2385
    %v2387 = vpop.f32.mrb[0].mxu0
    %2388 = vmatprep.mubr.f32.mxu0 0.0
    %2389 = vmatmul.mubr.f32.gmra.mrb[0].mxu0 %v2045
    %v2390 = vpop.f32.mrb[0].mxu0
    %v2391 = vadd.f32 %v2246, %v2390
    %v2392 = vpop.f32.mrb[0].mxu0
    %2393 = vmatprep.mubr.f32.mxu0 0.0
    %2394 = vmatmul.mubr.f32.gmra.mrb[0].mxu0 %v2046
    %v2395 = vpop.f32.mrb[0].mxu0
    %v2396 = vadd.f32 %v2251, %v2395
    %v2397 = vpop.f32.mrb[0].mxu0
    %2398 = vmatprep.mubr.f32.mxu0 0.0
    %2399 = vmatmul.mubr.f32.gmra.mrb[0].mxu0 %v2047
    %v2400 = vpop.f32.mrb[0].mxu0
    %v2401 = vadd.f32 %v2256, %v2400
    %v2402 = vpop.f32.mrb[0].mxu0
    %2403 = vmatprep.mubr.f32.mxu0 0.0
    %2404 = vmatmul.mubr.f32.gmra.mrb[0].mxu0 %v2048
    %v2405 = vpop.f32.mrb[0].mxu0
    %v2406 = vadd.f32 %v2261, %v2405
    %v2407 = vpop.f32.mrb[0].mxu0
    %2408 = vmatprep.mubr.f32.mxu0 0.0
    %2409 = vmatmul.mubr.f32.gmra.mrb[0].mxu0 %v2049
    %v2410 = vpop.f32.mrb[0].mxu0
    %v2411 = vadd.f32 %v2266, %v2410
    %v2412 = vpop.f32.mrb[0].mxu0
    %2413 = vmatprep.mubr.f32.mxu0 0.0
    %2414 = vmatmul.mubr.f32.gmra.mrb[0].mxu0 %v2050
    %v2415 = vpop.f32.mrb[0].mxu0
    %v2416 = vadd.f32 %v2271, %v2415
    %v2417 = vpop.f32.mrb[0].mxu0
    %2418 = vmatprep.mubr.f32.mxu0 0.0
    %2419 = vmatmul.mubr.f32.gmra.mrb[0].mxu0 %v2051
    %v2420 = vpop.f32.mrb[0].mxu0
    %v2421 = vadd.f32 %v2276, %v2420
    %v2422 = vpop.f32.mrb[0].mxu0
    %2423 = vmatprep.mubr.f32.mxu0 0.0
    %2424 = vmatmul.mubr.f32.gmra.mrb[0].mxu0 %v2052
    %v2425 = vpop.f32.mrb[0].mxu0
    %v2426 = vadd.f32 %v2281, %v2425
    %v2427 = vpop.f32.mrb[0].mxu0
    %2428 = vmatprep.mubr.f32.mxu0 0.0
    %2429 = vmatmul.mubr.f32.gmra.mrb[0].mxu0 %v2053
    %v2430 = vpop.f32.mrb[0].mxu0
    %v2431 = vadd.f32 %v2286, %v2430
    %v2432 = vpop.f32.mrb[0].mxu0
    %2433 = vmatprep.mubr.f32.mxu0 0.0
    %2434 = vmatmul.mubr.f32.gmra.mrb[0].mxu0 %v2054
    %v2435 = vpop.f32.mrb[0].mxu0
    %v2436 = vadd.f32 %v2291, %v2435
    %v2437 = vpop.f32.mrb[0].mxu0
    %2438 = vmatprep.mubr.f32.mxu0 0.0
    %2439 = vmatmul.mubr.f32.gmra.mrb[0].mxu0 %v2055
    %v2440 = vpop.f32.mrb[0].mxu0
    %v2441 = vadd.f32 %v2296, %v2440
    %v2442 = vpop.f32.mrb[0].mxu0
    %2443 = vdwg.mxu0
    %s2444 = scalar_lea.vmem [#allocation5], 256
    %v2445 = vld [vmem:[%s2444] sm:$0xff]
    %v2446 = vld [vmem:[%s2444 + $0x8] sm:$0xff]
    %v2447 = vld [vmem:[%s2444 + $0x10] sm:$0xff]
    %v2448 = vld [vmem:[%s2444 + $0x18] sm:$0xff]
    %v2449 = vld [vmem:[%s2444 + $0x20] sm:$0xff]
    %v2450 = vld [vmem:[%s2444 + $0x28] sm:$0xff]
    %v2451 = vld [vmem:[%s2444 + $0x30] sm:$0xff]
    %v2452 = vld [vmem:[%s2444 + $0x38] sm:$0xff]
    %v2453 = vld [vmem:[%s2444 + $0x40] sm:$0xff]
    %v2454 = vld [vmem:[%s2444 + $0x48] sm:$0xff]
    %v2455 = vld [vmem:[%s2444 + $0x50] sm:$0xff]
    %v2456 = vld [vmem:[%s2444 + $0x58] sm:$0xff]
    %v2457 = vld [vmem:[%s2444 + $0x60] sm:$0xff]
    %v2458 = vld [vmem:[%s2444 + $0x68] sm:$0xff]
    %v2459 = vld [vmem:[%s2444 + $0x70] sm:$0xff]
    %v2460 = vld [vmem:[%s2444 + $0x78] sm:$0xff]
    %2461 = vmatprep.subr.mxu0 0.0
    %2462 = vmatpush1.msra.mxu0 %v2445
    %2463 = vmatprep.subr.mxu0 0.0
    %2464 = vmatpush1.msra.mxu0 %v2446
    %2465 = vmatprep.subr.mxu0 0.0
    %2466 = vmatpush1.msra.mxu0 %v2447
    %2467 = vmatprep.subr.mxu0 0.0
    %2468 = vmatpush1.msra.mxu0 %v2448
    %2469 = vmatprep.subr.mxu0 0.0
    %2470 = vmatpush1.msra.mxu0 %v2449
    %2471 = vmatprep.subr.mxu0 0.0
    %2472 = vmatpush1.msra.mxu0 %v2450
    %2473 = vmatprep.subr.mxu0 0.0
    %2474 = vmatpush1.msra.mxu0 %v2451
    %2475 = vmatprep.subr.mxu0 0.0
    %2476 = vmatpush1.msra.mxu0 %v2452
    %2477 = vmatprep.subr.mxu0 0.0
    %2478 = vmatpush1.msra.mxu0 %v2453
    %2479 = vmatprep.subr.mxu0 0.0
    %2480 = vmatpush1.msra.mxu0 %v2454
    %2481 = vmatprep.subr.mxu0 0.0
    %2482 = vmatpush1.msra.mxu0 %v2455
    %2483 = vmatprep.subr.mxu0 0.0
    %2484 = vmatpush1.msra.mxu0 %v2456
    %2485 = vmatprep.subr.mxu0 0.0
    %2486 = vmatpush1.msra.mxu0 %v2457
    %2487 = vmatprep.subr.mxu0 0.0
    %2488 = vmatpush1.msra.mxu0 %v2458
    %2489 = vmatprep.subr.mxu0 0.0
    %2490 = vmatpush1.msra.mxu0 %v2459
    %2491 = vmatprep.subr.mxu0 0.0
    %2492 = vmatpush1.msra.mxu0 %v2460
    %2493 = vmatprep.subr.mxu0 0.0
    %2494 = vmatpush1.msra.mxu0 0.0
    %2495 = vmatprep.subr.mxu0 0.0
    %2496 = vmatpush1.msra.mxu0 0.0
    %2497 = vmatprep.subr.mxu0 0.0
    %2498 = vmatpush1.msra.mxu0 0.0
    %2499 = vmatprep.subr.mxu0 0.0
    %2500 = vmatpush1.msra.mxu0 0.0
    %2501 = vmatprep.subr.mxu0 0.0
    %2502 = vmatpush1.msra.mxu0 0.0
    %2503 = vmatprep.subr.mxu0 0.0
    %2504 = vmatpush1.msra.mxu0 0.0
    %2505 = vmatprep.subr.mxu0 0.0
    %2506 = vmatpush1.msra.mxu0 0.0
    %2507 = vmatprep.subr.mxu0 0.0
    %2508 = vmatpush1.msra.mxu0 0.0
    %2509 = vmatprep.subr.mxu0 0.0
    %2510 = vmatpush1.msra.mxu0 0.0
    %2511 = vmatprep.subr.mxu0 0.0
    %2512 = vmatpush1.msra.mxu0 0.0
    %2513 = vmatprep.subr.mxu0 0.0
    %2514 = vmatpush1.msra.mxu0 0.0
    %2515 = vmatprep.subr.mxu0 0.0
    %2516 = vmatpush1.msra.mxu0 0.0
    %2517 = vmatprep.subr.mxu0 0.0
    %2518 = vmatpush1.msra.mxu0 0.0
    %2519 = vmatprep.subr.mxu0 0.0
    %2520 = vmatpush1.msra.mxu0 0.0
    %2521 = vmatprep.subr.mxu0 0.0
    %2522 = vmatpush1.msra.mxu0 0.0
    %2523 = vmatprep.subr.mxu0 0.0
    %2524 = vmatpush1.msra.mxu0 0.0
    %2525 = vmatprep.mubr.f32.mxu0 0.0
    %2526 = vmatmul.mubr.f32.gmra.mrb[0].mxu0 %v2105
    %v2527 = vpop.f32.mrb[0].mxu0
    %v2528 = vadd.f32 0.0, %v2527
    %v2529 = vpop.f32.mrb[0].mxu0
    %2530 = vmatprep.mubr.f32.mxu0 0.0
    %2531 = vmatmul.mubr.f32.gmra.mrb[0].mxu0 %v2106
    %v2532 = vpop.f32.mrb[0].mxu0
    %v2533 = vadd.f32 0.0, %v2532
    %v2534 = vpop.f32.mrb[0].mxu0
    %2535 = vmatprep.mubr.f32.mxu0 0.0
    %2536 = vmatmul.mubr.f32.gmra.mrb[0].mxu0 %v2107
    %v2537 = vpop.f32.mrb[0].mxu0
    %v2538 = vadd.f32 0.0, %v2537
    %v2539 = vpop.f32.mrb[0].mxu0
    %2540 = vmatprep.mubr.f32.mxu0 0.0
    %2541 = vmatmul.mubr.f32.gmra.mrb[0].mxu0 %v2108
    %v2542 = vpop.f32.mrb[0].mxu0
    %v2543 = vadd.f32 0.0, %v2542
    %v2544 = vpop.f32.mrb[0].mxu0
    %2545 = vmatprep.mubr.f32.mxu0 0.0
    %2546 = vmatmul.mubr.f32.gmra.mrb[0].mxu0 %v2109
    %v2547 = vpop.f32.mrb[0].mxu0
    %v2548 = vadd.f32 0.0, %v2547
    %v2549 = vpop.f32.mrb[0].mxu0
    %2550 = vmatprep.mubr.f32.mxu0 0.0
    %2551 = vmatmul.mubr.f32.gmra.mrb[0].mxu0 %v2110
    %v2552 = vpop.f32.mrb[0].mxu0
    %v2553 = vadd.f32 0.0, %v2552
    %v2554 = vpop.f32.mrb[0].mxu0
    %2555 = vmatprep.mubr.f32.mxu0 0.0
    %2556 = vmatmul.mubr.f32.gmra.mrb[0].mxu0 %v2111
    %v2557 = vpop.f32.mrb[0].mxu0
    %v2558 = vadd.f32 0.0, %v2557
    %v2559 = vpop.f32.mrb[0].mxu0
    %2560 = vmatprep.mubr.f32.mxu0 0.0
    %2561 = vmatmul.mubr.f32.gmra.mrb[0].mxu0 %v2112
    %v2562 = vpop.f32.mrb[0].mxu0
    %v2563 = vadd.f32 0.0, %v2562
    %v2564 = vpop.f32.mrb[0].mxu0
    %2565 = vmatprep.mubr.f32.mxu0 0.0
    %2566 = vmatmul.mubr.f32.gmra.mrb[0].mxu0 %v2113
    %v2567 = vpop.f32.mrb[0].mxu0
    %v2568 = vadd.f32 0.0, %v2567
    %v2569 = vpop.f32.mrb[0].mxu0
    %2570 = vmatprep.mubr.f32.mxu0 0.0
    %2571 = vmatmul.mubr.f32.gmra.mrb[0].mxu0 %v2114
    %v2572 = vpop.f32.mrb[0].mxu0
    %v2573 = vadd.f32 0.0, %v2572
    %v2574 = vpop.f32.mrb[0].mxu0
    %2575 = vmatprep.mubr.f32.mxu0 0.0
    %2576 = vmatmul.mubr.f32.gmra.mrb[0].mxu0 %v2115
    %v2577 = vpop.f32.mrb[0].mxu0
    %v2578 = vadd.f32 0.0, %v2577
    %v2579 = vpop.f32.mrb[0].mxu0
    %2580 = vmatprep.mubr.f32.mxu0 0.0
    %2581 = vmatmul.mubr.f32.gmra.mrb[0].mxu0 %v2116
    %v2582 = vpop.f32.mrb[0].mxu0
    %v2583 = vadd.f32 0.0, %v2582
    %v2584 = vpop.f32.mrb[0].mxu0
    %2585 = vmatprep.mubr.f32.mxu0 0.0
    %2586 = vmatmul.mubr.f32.gmra.mrb[0].mxu0 %v2117
    %v2587 = vpop.f32.mrb[0].mxu0
    %v2588 = vadd.f32 0.0, %v2587
    %v2589 = vpop.f32.mrb[0].mxu0
    %2590 = vmatprep.mubr.f32.mxu0 0.0
    %2591 = vmatmul.mubr.f32.gmra.mrb[0].mxu0 %v2118
    %v2592 = vpop.f32.mrb[0].mxu0
    %v2593 = vadd.f32 0.0, %v2592
    %v2594 = vpop.f32.mrb[0].mxu0
    %2595 = vmatprep.mubr.f32.mxu0 0.0
    %2596 = vmatmul.mubr.f32.gmra.mrb[0].mxu0 %v2119
    %v2597 = vpop.f32.mrb[0].mxu0
    %v2598 = vadd.f32 0.0, %v2597
    %v2599 = vpop.f32.mrb[0].mxu0
    %2600 = vmatprep.mubr.f32.mxu0 0.0
    %2601 = vmatmul.mubr.f32.gmra.mrb[0].mxu0 %v2120
    %v2602 = vpop.f32.mrb[0].mxu0
    %v2603 = vadd.f32 0.0, %v2602
    %v2604 = vpop.f32.mrb[0].mxu0
    %2605 = vdwg.mxu0
    %v2606 = vadd.f32 %v2366, %v2528
    %v2607 = vadd.f32 %v2371, %v2533
    %v2608 = vadd.f32 %v2376, %v2538
    %v2609 = vadd.f32 %v2381, %v2543
    %v2610 = vadd.f32 %v2386, %v2548
    %v2611 = vadd.f32 %v2391, %v2553
    %v2612 = vadd.f32 %v2396, %v2558
    %v2613 = vadd.f32 %v2401, %v2563
    %v2614 = vadd.f32 %v2406, %v2568
    %v2615 = vadd.f32 %v2411, %v2573
    %v2616 = vadd.f32 %v2416, %v2578
    %v2617 = vadd.f32 %v2421, %v2583
    %v2618 = vadd.f32 %v2426, %v2588
    %v2619 = vadd.f32 %v2431, %v2593
    %v2620 = vadd.f32 %v2436, %v2598
    %v2621 = vadd.f32 %v2441, %v2603
    %v2622 = vld [vmem:[%s7] sm:$0x1]
    %v2624 = vlaneseq
    %v2625 = vshrl.u32 %v2624, 7
    %v2626 = vsub.s32 0, %v2625
    %v2627 = vrot.slane %v2622, %v2626
    %v2629 = vadd.f32 %v2606, %v2627
    %v2630 = vadd.f32 %v2607, %v2627
    %v2631 = vadd.f32 %v2608, %v2627
    %v2632 = vadd.f32 %v2609, %v2627
    %v2633 = vadd.f32 %v2610, %v2627
    %v2634 = vadd.f32 %v2611, %v2627
    %v2635 = vadd.f32 %v2612, %v2627
    %v2636 = vadd.f32 %v2613, %v2627
    %v2637 = vadd.f32 %v2614, %v2627
    %v2638 = vadd.f32 %v2615, %v2627
    %v2639 = vadd.f32 %v2616, %v2627
    %v2640 = vadd.f32 %v2617, %v2627
    %v2641 = vadd.f32 %v2618, %v2627
    %v2642 = vadd.f32 %v2619, %v2627
    %v2643 = vadd.f32 %v2620, %v2627
    %v2644 = vadd.f32 %v2621, %v2627
    %v2645 = vmul.f32 %v2629, 0.5
    %v2646 = vmul.f32 %v2630, 0.5
    %v2647 = vmul.f32 %v2631, 0.5
    %v2648 = vmul.f32 %v2632, 0.5
    %v2649 = vmul.f32 %v2633, 0.5
    %v2650 = vmul.f32 %v2634, 0.5
    %v2651 = vmul.f32 %v2635, 0.5
    %v2652 = vmul.f32 %v2636, 0.5
    %v2653 = vmul.f32 %v2637, 0.5
    %v2654 = vmul.f32 %v2638, 0.5
    %v2655 = vmul.f32 %v2639, 0.5
    %v2656 = vmul.f32 %v2640, 0.5
    %v2657 = vmul.f32 %v2641, 0.5
    %v2658 = vmul.f32 %v2642, 0.5
    %v2659 = vmul.f32 %v2643, 0.5
    %v2660 = vmul.f32 %v2644, 0.5
    %v2661 = vmul.f32 %v2629, 0.70710677
    %v2662 = vmul.f32 %v2630, 0.70710677
    %v2663 = vmul.f32 %v2631, 0.70710677
    %v2664 = vmul.f32 %v2632, 0.70710677
    %v2665 = vmul.f32 %v2633, 0.70710677
    %v2666 = vmul.f32 %v2634, 0.70710677
    %v2667 = vmul.f32 %v2635, 0.70710677
    %v2668 = vmul.f32 %v2636, 0.70710677
    %v2669 = vmul.f32 %v2637, 0.70710677
    %v2670 = vmul.f32 %v2638, 0.70710677
    %v2671 = vmul.f32 %v2639, 0.70710677
    %v2672 = vmul.f32 %v2640, 0.70710677
    %v2673 = vmul.f32 %v2641, 0.70710677
    %v2674 = vmul.f32 %v2642, 0.70710677
    %v2675 = vmul.f32 %v2643, 0.70710677
    %v2676 = vmul.f32 %v2644, 0.70710677
    %v2677 = verf.f32.pop %v2661
    %v2678 = verf.f32.pop %v2662
    %v2679 = verf.f32.pop %v2663
    %v2680 = verf.f32.pop %v2664
    %v2681 = verf.f32.pop %v2665
    %v2682 = verf.f32.pop %v2666
    %v2683 = verf.f32.pop %v2667
    %v2684 = verf.f32.pop %v2668
    %v2685 = verf.f32.pop %v2669
    %v2686 = verf.f32.pop %v2670
    %v2687 = verf.f32.pop %v2671
    %v2688 = verf.f32.pop %v2672
    %v2689 = verf.f32.pop %v2673
    %v2690 = verf.f32.pop %v2674
    %v2691 = verf.f32.pop %v2675
    %v2692 = verf.f32.pop %v2676
    %v2693 = vadd.f32 %v2677, 1.0
    %v2694 = vadd.f32 %v2678, 1.0
    %v2695 = vadd.f32 %v2679, 1.0
    %v2696 = vadd.f32 %v2680, 1.0
    %v2697 = vadd.f32 %v2681, 1.0
    %v2698 = vadd.f32 %v2682, 1.0
    %v2699 = vadd.f32 %v2683, 1.0
    %v2700 = vadd.f32 %v2684, 1.0
    %v2701 = vadd.f32 %v2685, 1.0
    %v2702 = vadd.f32 %v2686, 1.0
    %v2703 = vadd.f32 %v2687, 1.0
    %v2704 = vadd.f32 %v2688, 1.0
    %v2705 = vadd.f32 %v2689, 1.0
    %v2706 = vadd.f32 %v2690, 1.0
    %v2707 = vadd.f32 %v2691, 1.0
    %v2708 = vadd.f32 %v2692, 1.0
    %v2709 = vmul.f32 %v2645, %v2693
    %v2710 = vmul.f32 %v2646, %v2694
    %v2711 = vmul.f32 %v2647, %v2695
    %v2712 = vmul.f32 %v2648, %v2696
    %v2713 = vmul.f32 %v2649, %v2697
    %v2714 = vmul.f32 %v2650, %v2698
    %v2715 = vmul.f32 %v2651, %v2699
    %v2716 = vmul.f32 %v2652, %v2700
    %v2717 = vmul.f32 %v2653, %v2701
    %v2718 = vmul.f32 %v2654, %v2702
    %v2719 = vmul.f32 %v2655, %v2703
    %v2720 = vmul.f32 %v2656, %v2704
    %v2721 = vmul.f32 %v2657, %v2705
    %v2722 = vmul.f32 %v2658, %v2706
    %v2723 = vmul.f32 %v2659, %v2707
    %v2724 = vmul.f32 %v2660, %v2708
    %v2725 = vld [vmem:[%s1] sm:$0xff]
    %2726 = vmatprep.subr.mxu0 0.0
    %2727 = vmatpush1.msra.mxu0 %v2709
    %2728 = vmatprep.subr.mxu0 0.0
    %2729 = vmatpush1.msra.mxu0 %v2710
    %2730 = vmatprep.subr.mxu0 0.0
    %2731 = vmatpush1.msra.mxu0 %v2711
    %2732 = vmatprep.subr.mxu0 0.0
    %2733 = vmatpush1.msra.mxu0 %v2712
    %2734 = vmatprep.subr.mxu0 0.0
    %2735 = vmatpush1.msra.mxu0 %v2713
    %2736 = vmatprep.subr.mxu0 0.0
    %2737 = vmatpush1.msra.mxu0 %v2714
    %2738 = vmatprep.subr.mxu0 0.0
    %2739 = vmatpush1.msra.mxu0 %v2715
    %2740 = vmatprep.subr.mxu0 0.0
    %2741 = vmatpush1.msra.mxu0 %v2716
    %2742 = vmatprep.subr.mxu0 0.0
    %2743 = vmatpush1.msra.mxu0 %v2717
    %2744 = vmatprep.subr.mxu0 0.0
    %2745 = vmatpush1.msra.mxu0 %v2718
    %2746 = vmatprep.subr.mxu0 0.0
    %2747 = vmatpush1.msra.mxu0 %v2719
    %2748 = vmatprep.subr.mxu0 0.0
    %2749 = vmatpush1.msra.mxu0 %v2720
    %2750 = vmatprep.subr.mxu0 0.0
    %2751 = vmatpush1.msra.mxu0 %v2721
    %2752 = vmatprep.subr.mxu0 0.0
    %2753 = vmatpush1.msra.mxu0 %v2722
    %2754 = vmatprep.subr.mxu0 0.0
    %2755 = vmatpush1.msra.mxu0 %v2723
    %2756 = vmatprep.subr.mxu0 0.0
    %2757 = vmatpush1.msra.mxu0 %v2724
    %2758 = vmatprep.subr.mxu0 0.0
    %2759 = vmatpush1.msra.mxu0 0.0
    %2760 = vmatprep.subr.mxu0 0.0
    %2761 = vmatpush1.msra.mxu0 0.0
    %2762 = vmatprep.subr.mxu0 0.0
    %2763 = vmatpush1.msra.mxu0 0.0
    %2764 = vmatprep.subr.mxu0 0.0
    %2765 = vmatpush1.msra.mxu0 0.0
    %2766 = vmatprep.subr.mxu0 0.0
    %2767 = vmatpush1.msra.mxu0 0.0
    %2768 = vmatprep.subr.mxu0 0.0
    %2769 = vmatpush1.msra.mxu0 0.0
    %2770 = vmatprep.subr.mxu0 0.0
    %2771 = vmatpush1.msra.mxu0 0.0
    %2772 = vmatprep.subr.mxu0 0.0
    %2773 = vmatpush1.msra.mxu0 0.0
    %2774 = vmatprep.subr.mxu0 0.0
    %2775 = vmatpush1.msra.mxu0 0.0
    %2776 = vmatprep.subr.mxu0 0.0
    %2777 = vmatpush1.msra.mxu0 0.0
    %2778 = vmatprep.subr.mxu0 0.0
    %2779 = vmatpush1.msra.mxu0 0.0
    %2780 = vmatprep.subr.mxu0 0.0
    %2781 = vmatpush1.msra.mxu0 0.0
    %2782 = vmatprep.subr.mxu0 0.0
    %2783 = vmatpush1.msra.mxu0 0.0
    %2784 = vmatprep.subr.mxu0 0.0
    %2785 = vmatpush1.msra.mxu0 0.0
    %2786 = vmatprep.subr.mxu0 0.0
    %2787 = vmatpush1.msra.mxu0 0.0
    %2788 = vmatprep.subr.mxu0 0.0
    %2789 = vmatpush1.msra.mxu0 0.0
    %2790 = vmatprep.mubr.f32.mxu0 0.0
    %2791 = vmatmul.mubr.f32.gmra.mrb[0].mxu0 %v2725
    %v2792 = vpop.f32.mrb[0].mxu0
    %v2793 = vadd.f32 0.0, %v2792
    %v2794 = vpop.f32.mrb[0].mxu0
    %2795 = vdwg.mxu0
    %2796 = vst [vmem:[#allocation7] sm:$0xff] %v2793
    // Predicated region
    $region42: #{tpu_custom_call.1} parent=1 // pred_check
      _
    $region43: #{tpu_custom_call.1} parent=1 // pred_check_branch
      %2798 = sbr.rel (0) target = $region45
    $region44: #{tpu_custom_call.1} parent=1 // pred_region
      %s2800 = ssub.s32 128, 128
      %2801 = vsyncadd [#allocation4], %s2800
      %s2803 = sshll.u32 [#allocation7], 4
      %s2804 = int_to_ptr.vmem [resolvable:$true] %s2803
      %2806 = dma.vmem_to_hbm [thread:$0]  %s2804, 128, %s8, [#allocation4]
    $region45: #{tpu_custom_call.1} parent=1 // pred_fallthru
      _
    // Predicated region
    $region46: #{tpu_custom_call.1} parent=1 // pred_check
      _
    $region47: #{tpu_custom_call.1} parent=1 // pred_check_branch
      %2808 = sbr.rel (0) target = $region49
    $region48: #{tpu_custom_call.1} parent=1 // pred_region
      %2809 = dma.done [#allocation4], 128
    $region49: #{tpu_custom_call.1} parent=1 // pred_fallthru
      _
    %2810 = vsyncpa [#allocation3], 1
    %2811 = vsyncpa [#allocation6], 1
    %2812 = vsyncpa [#allocation4], 1

</llo_original>
